<compile_context>
chip_gen: v6e
topology: v6e:2x2x1
jax: 0.10.0
libtpu: 0.0.40
codegen_flags: <defaults>
</compile_context>

<pallas_src>
import functools

import jax
import jax.numpy as jnp
from jax.experimental import pallas as pl
from jax.experimental.pallas import tpu as pltpu


def _ppff_kernel(x_ref, w1_ref, b1_ref, w2_ref, b2_ref, a2_ref, bln_ref,
                 out_ref, *, eps):
    x = x_ref[...]                                   # (tm, d_hid) f32
    d_hid = x.shape[-1]
    mm_dtype = w1_ref.dtype                          # bf16 (or f32) matmul feed

    # Fused (block-diagonal) FFN: full-width matmuls, MXU at full cadence,
    # no unaligned slicing / concat of the content & positional partitions.
    h = jnp.dot(x.astype(mm_dtype), w1_ref[...],
                preferred_element_type=jnp.float32) + b1_ref[...]
    h = jnp.maximum(h, 0.0)                          # ReLU (relu_dropout = identity in eval)
    o = jnp.dot(h.astype(mm_dtype), w2_ref[...],
                preferred_element_type=jnp.float32) + b2_ref[...]

    out = o + x                                      # residual (residual_dropout = identity)

    # LayerNormalization with torch.std semantics (unbiased, ddof=1), eps on sigma.
    mu = jnp.mean(out, axis=-1, keepdims=True)
    c = out - mu
    var_unbiased = jnp.sum(c * c, axis=-1, keepdims=True) * (1.0 / (d_hid - 1))
    sigma = jnp.sqrt(var_unbiased)
    inv = pl.reciprocal(sigma + eps, approx=True)    # EUP slot; keeps VALU free
    out_ref[...] = (c * inv * a2_ref[...] + bln_ref[...]).astype(out_ref.dtype)


def _fuse_block_diagonal(params, compute_dtype):
    """Fuse the content/positional branches into block-diagonal W1/W2 (exact)."""
    w1c, w1p = params["w1c"], params["w1p"]
    w2c, w2p = params["w2c"], params["w2p"]
    d_content, dff2 = w1c.shape
    d_positional = w1p.shape[0]
    d_hid = d_content + d_positional
    d_ff = 2 * dff2

    w1 = jnp.zeros((d_hid, d_ff), jnp.float32)
    w1 = w1.at[:d_content, :dff2].set(w1c)
    w1 = w1.at[d_content:, dff2:].set(w1p)
    b1 = jnp.concatenate([params["b1c"], params["b1p"]], axis=-1)     # (1, d_ff)

    w2 = jnp.zeros((d_ff, d_hid), jnp.float32)
    w2 = w2.at[:dff2, :d_content].set(w2c)
    w2 = w2.at[dff2:, d_content:].set(w2p)
    b2 = jnp.concatenate([params["b2c"], params["b2p"]], axis=-1)     # (1, d_hid)

    return (w1.astype(compute_dtype), b1, w2.astype(compute_dtype), b2,
            params["a2"], params["bln"])


def partitioned_ppff(x, params, *, eps=1e-3, tm=256,
                     compute_dtype=jnp.bfloat16):
    """x: (N, d_hid) float32; returns (N, d_hid) float32."""
    N, d_hid = x.shape
    w1, b1, w2, b2, a2, bln = _fuse_block_diagonal(params, compute_dtype)
    d_ff = w1.shape[1]

    # Pad the token axis to a tile multiple (padded rows are harmless: they
    # layer-norm to b_2 and are sliced off below).
    n_pad = pl.cdiv(N, tm) * tm
    x_p = x if n_pad == N else jnp.pad(x, ((0, n_pad - N), (0, 0)))
    grid = (n_pad // tm,)

    # Grid-invariant operands: resident in VMEM for the whole grid, single
    # buffered (no point double-buffering something that never changes).
    def resident(shape):
        return pl.BlockSpec(shape, lambda i: (0, 0),
                            pipeline_mode=pl.Buffered(1))

    # Explicit VMEM budget: weights (1x) + double-buffered x/out tiles +
    # intermediates, with 2x headroom; floor 8 MiB, cap 64 MiB (v7x-safe).
    weight_bytes = sum(int(a.size) * a.dtype.itemsize
                       for a in (w1, b1, w2, b2, a2, bln))
    tile_bytes = tm * d_hid * 4
    inter_bytes = 2 * tm * d_ff * 4 + 3 * tm * d_hid * 4
    vmem_limit = int(min(max(2 * (weight_bytes + 4 * tile_bytes + inter_bytes),
                             8 * 2 ** 20),
                         64 * 2 ** 20))

    out = pl.pallas_call(
        functools.partial(_ppff_kernel, eps=eps),
        out_shape=jax.ShapeDtypeStruct((n_pad, d_hid), jnp.float32),
        grid_spec=pltpu.PrefetchScalarGridSpec(
            num_scalar_prefetch=0,
            grid=grid,
            in_specs=[
                pl.BlockSpec((tm, d_hid), lambda i: (i, 0)),    # x tile (double-buffered)
                resident((d_hid, d_ff)), resident((1, d_ff)),   # fused W1, b1
                resident((d_ff, d_hid)), resident((1, d_hid)),  # fused W2, b2
                resident((1, d_hid)), resident((1, d_hid)),     # a_2, b_2 (LayerNorm)
            ],
            out_specs=pl.BlockSpec((tm, d_hid), lambda i: (i, 0)),
        ),
        compiler_params=pltpu.CompilerParams(
            dimension_semantics=("parallel",),      # shards the token loop on v7x's 2 TCs
            vmem_limit_bytes=vmem_limit,
        ),
    )(x_p, w1, b1, w2, b2, a2, bln)

    return out[:N] if n_pad != N else out


def init_params(key, d_hid, d_ff, d_positional):
    d_content = d_hid - d_positional
    dff2 = d_ff // 2
    ks = jax.random.split(key, 8)

    def lin(kw, kb, fan_in, fan_out):
        # Weights stored already transposed (fan_in, fan_out) so x @ W == x @ W_torch^T.
        bound = 1.0 / jnp.sqrt(fan_in)
        w = jax.random.uniform(kw, (fan_in, fan_out), jnp.float32, -bound, bound)
        b = jax.random.uniform(kb, (1, fan_out), jnp.float32, -bound, bound)
        return w, b

    w1c, b1c = lin(ks[0], ks[1], d_content, dff2)
    w2c, b2c = lin(ks[2], ks[3], dff2, d_content)
    w1p, b1p = lin(ks[4], ks[5], d_positional, dff2)
    w2p, b2p = lin(ks[6], ks[7], dff2, d_positional)

    return dict(
        w1c=w1c, b1c=b1c, w2c=w2c, b2c=b2c,
        w1p=w1p, b1p=b1p, w2p=w2p, b2p=b2p,
        a2=jnp.ones((1, d_hid), jnp.float32),
        bln=jnp.zeros((1, d_hid), jnp.float32),
    )


def _reference(x, p, d_positional, eps=1e-3):
    """Pure-JAX f32 reference with the original (unfused) two-branch layout."""
    d_hid = x.shape[-1]
    d_content = d_hid - d_positional
    xc, xp = x[:, :d_content], x[:, d_content:]
    oc = jnp.maximum(xc @ p["w1c"] + p["b1c"], 0.0) @ p["w2c"] + p["b2c"]
    op = jnp.maximum(xp @ p["w1p"] + p["b1p"], 0.0) @ p["w2p"] + p["b2p"]
    out = jnp.concatenate([oc, op], -1) + x
    mu = jnp.mean(out, -1, keepdims=True)
    c = out - mu
    sigma = jnp.sqrt(jnp.sum(c * c, -1, keepdims=True) / (d_hid - 1))
    return c / (sigma + eps) * p["a2"] + p["bln"]


if __name__ == "__main__":
    d_hid, d_ff, d_positional = 64, 64, 16
    N = 500  # intentionally ragged; wrapper pads the token axis to the row tile

    key = jax.random.PRNGKey(0)
    kx, kp = jax.random.split(key)
    x = jax.random.normal(kx, (N, d_hid), jnp.float32)
    params = init_params(kp, d_hid, d_ff, d_positional)

    y_ref = _reference(x, params, d_positional)

    # Default path: bf16 matmul feed, f32 accumulation and epilogue.
    y_bf16 = jax.block_until_ready(
        partitioned_ppff(x, params, tm=256, compute_dtype=jnp.bfloat16))
    assert y_bf16.shape == (N, d_hid)
    assert jnp.allclose(y_bf16, y_ref, atol=5e-2, rtol=5e-2), "bf16 kernel mismatch"

    # Full-precision path validates the block-diagonal fusion exactly.
    y_f32 = jax.block_until_ready(
        partitioned_ppff(x, params, tm=256, compute_dtype=jnp.float32))
    assert jnp.allclose(y_f32, y_ref, atol=5e-3, rtol=5e-3), "f32 kernel mismatch"

    print("KERNEL_OK")
</pallas_src>

<mosaic_0001>
module attributes {stable_mosaic.version = 11 : i64} {
  func.func @_ppff_kernel(%arg0: i32, %arg1: memref<256x64xf32, #tpu.memory_space<vmem>>, %arg2: memref<64x64xbf16, #tpu.memory_space<vmem>>, %arg3: memref<1x64xf32, #tpu.memory_space<vmem>>, %arg4: memref<64x64xbf16, #tpu.memory_space<vmem>>, %arg5: memref<1x64xf32, #tpu.memory_space<vmem>>, %arg6: memref<1x64xf32, #tpu.memory_space<vmem>>, %arg7: memref<1x64xf32, #tpu.memory_space<vmem>>, %arg8: memref<256x64xf32, #tpu.memory_space<vmem>>) attributes {dimension_semantics = [#tpu.dimension_semantics<parallel>], iteration_bounds = array<i64: 2>, scalar_prefetch = 0 : i64, scratch_operands = 0 : i64, tpu.core_type = #tpu.core_type<tc>, window_params = [{transform_indices = @transform_0, window_bounds = array<i64: 256, 64>}, {pipeline_mode = #tpu.pipeline_mode<synchronous>, transform_indices = @transform_1, window_bounds = array<i64: 64, 64>}, {pipeline_mode = #tpu.pipeline_mode<synchronous>, transform_indices = @transform_2, window_bounds = array<i64: 1, 64>}, {pipeline_mode = #tpu.pipeline_mode<synchronous>, transform_indices = @transform_3, window_bounds = array<i64: 64, 64>}, {pipeline_mode = #tpu.pipeline_mode<synchronous>, transform_indices = @transform_4, window_bounds = array<i64: 1, 64>}, {pipeline_mode = #tpu.pipeline_mode<synchronous>, transform_indices = @transform_5, window_bounds = array<i64: 1, 64>}, {pipeline_mode = #tpu.pipeline_mode<synchronous>, transform_indices = @transform_6, window_bounds = array<i64: 1, 64>}, {transform_indices = @transform_7, window_bounds = array<i64: 256, 64>}]} {
    %c0 = arith.constant 0 : index
    %c0_0 = arith.constant 0 : index
    %0 = vector.load %arg1[%c0, %c0_0] : memref<256x64xf32, #tpu.memory_space<vmem>>, vector<256x64xf32>
    %1 = arith.truncf %0 : vector<256x64xf32> to vector<256x64xbf16>
    %c0_1 = arith.constant 0 : index
    %c0_2 = arith.constant 0 : index
    %2 = vector.load %arg2[%c0_1, %c0_2] : memref<64x64xbf16, #tpu.memory_space<vmem>>, vector<64x64xbf16>
    %cst = arith.constant dense<0.000000e+00> : vector<256x64xf32>
    %3 = tpu.matmul %1, %2, %cst {dimension_numbers = #tpu.dot_dimension_numbers<[1], [0], [0], [1], [0, 0, 1, 1], [], []>} : vector<256x64xbf16>, vector<64x64xbf16>, vector<256x64xf32> -> vector<256x64xf32>
    %c0_3 = arith.constant 0 : index
    %c0_4 = arith.constant 0 : index
    %4 = vector.load %arg3[%c0_3, %c0_4] : memref<1x64xf32, #tpu.memory_space<vmem>>, vector<1x64xf32>
    %5 = vector.broadcast %4 : vector<1x64xf32> to vector<256x64xf32>
    %6 = arith.addf %3, %5 : vector<256x64xf32>
    %cst_5 = arith.constant 0.000000e+00 : f32
    %7 = vector.broadcast %cst_5 : f32 to vector<256x64xf32>
    %8 = arith.maximumf %6, %7 : vector<256x64xf32>
    %9 = arith.truncf %8 : vector<256x64xf32> to vector<256x64xbf16>
    %c0_6 = arith.constant 0 : index
    %c0_7 = arith.constant 0 : index
    %10 = vector.load %arg4[%c0_6, %c0_7] : memref<64x64xbf16, #tpu.memory_space<vmem>>, vector<64x64xbf16>
    %cst_8 = arith.constant dense<0.000000e+00> : vector<256x64xf32>
    %11 = tpu.matmul %9, %10, %cst_8 {dimension_numbers = #tpu.dot_dimension_numbers<[1], [0], [0], [1], [0, 0, 1, 1], [], []>} : vector<256x64xbf16>, vector<64x64xbf16>, vector<256x64xf32> -> vector<256x64xf32>
    %c0_9 = arith.constant 0 : index
    %c0_10 = arith.constant 0 : index
    %12 = vector.load %arg5[%c0_9, %c0_10] : memref<1x64xf32, #tpu.memory_space<vmem>>, vector<1x64xf32>
    %13 = vector.broadcast %12 : vector<1x64xf32> to vector<256x64xf32>
    %14 = arith.addf %11, %13 : vector<256x64xf32>
    %15 = arith.addf %14, %0 : vector<256x64xf32>
    %cst_11 = arith.constant dense<0.000000e+00> : vector<256xf32>
    %16 = vector.multi_reduction <add>, %15, %cst_11 [1] : vector<256x64xf32> to vector<256xf32>
    %17 = vector.shape_cast %16 : vector<256xf32> to vector<256x1xf32>
    %cst_12 = arith.constant 6.400000e+01 : f32
    %18 = vector.broadcast %cst_12 : f32 to vector<256x1xf32>
    %19 = arith.divf %17, %18 : vector<256x1xf32>
    %20 = vector.broadcast %19 : vector<256x1xf32> to vector<256x64xf32>
    %21 = arith.subf %15, %20 : vector<256x64xf32>
    %22 = arith.mulf %21, %21 : vector<256x64xf32>
    %cst_13 = arith.constant dense<0.000000e+00> : vector<256xf32>
    %23 = vector.multi_reduction <add>, %22, %cst_13 [1] : vector<256x64xf32> to vector<256xf32>
    %24 = vector.shape_cast %23 : vector<256xf32> to vector<256x1xf32>
    %cst_14 = arith.constant 0.0158730168 : f32
    %25 = vector.broadcast %cst_14 : f32 to vector<256x1xf32>
    %26 = arith.mulf %24, %25 : vector<256x1xf32>
    %27 = math.sqrt %26 : vector<256x1xf32>
    %cst_15 = arith.constant 1.000000e-03 : f32
    %28 = vector.broadcast %cst_15 : f32 to vector<256x1xf32>
    %29 = arith.addf %27, %28 : vector<256x1xf32>
    %30 = tpu.reciprocal %29 {approx = true} : vector<256x1xf32> -> vector<256x1xf32>
    %31 = vector.broadcast %30 : vector<256x1xf32> to vector<256x64xf32>
    %32 = arith.mulf %21, %31 : vector<256x64xf32>
    %c0_16 = arith.constant 0 : index
    %c0_17 = arith.constant 0 : index
    %33 = vector.load %arg6[%c0_16, %c0_17] : memref<1x64xf32, #tpu.memory_space<vmem>>, vector<1x64xf32>
    %34 = vector.broadcast %33 : vector<1x64xf32> to vector<256x64xf32>
    %35 = arith.mulf %32, %34 : vector<256x64xf32>
    %c0_18 = arith.constant 0 : index
    %c0_19 = arith.constant 0 : index
    %36 = vector.load %arg7[%c0_18, %c0_19] : memref<1x64xf32, #tpu.memory_space<vmem>>, vector<1x64xf32>
    %37 = vector.broadcast %36 : vector<1x64xf32> to vector<256x64xf32>
    %38 = arith.addf %35, %37 : vector<256x64xf32>
    %c0_20 = arith.constant 0 : index
    %c0_21 = arith.constant 0 : index
    %39 = vector.load %arg8[%c0_20, %c0_21] : memref<256x64xf32, #tpu.memory_space<vmem>>, vector<256x64xf32>
    tpu.vector_store %arg8[%c0_20, %c0_21], %38 {strides = array<i32>} : memref<256x64xf32, #tpu.memory_space<vmem>>, vector<256x64xf32>,
    return
  }
  func.func @transform_0(%arg0: i32) -> (i32, i32) {
    %c0_i32 = arith.constant 0 : i32
    %c0_i32_0 = arith.constant 0 : i32
    return %arg0, %c0_i32 : i32, i32
  }
  func.func @transform_1(%arg0: i32) -> (i32, i32) {
    %c0_i32 = arith.constant 0 : i32
    %c0_i32_0 = arith.constant 0 : i32
    %c0_i32_1 = arith.constant 0 : i32
    return %c0_i32, %c0_i32_0 : i32, i32
  }
  func.func @transform_2(%arg0: i32) -> (i32, i32) {
    %c0_i32 = arith.constant 0 : i32
    %c0_i32_0 = arith.constant 0 : i32
    %c0_i32_1 = arith.constant 0 : i32
    return %c0_i32, %c0_i32_0 : i32, i32
  }
  func.func @transform_3(%arg0: i32) -> (i32, i32) {
    %c0_i32 = arith.constant 0 : i32
    %c0_i32_0 = arith.constant 0 : i32
    %c0_i32_1 = arith.constant 0 : i32
    return %c0_i32, %c0_i32_0 : i32, i32
  }
  func.func @transform_4(%arg0: i32) -> (i32, i32) {
    %c0_i32 = arith.constant 0 : i32
    %c0_i32_0 = arith.constant 0 : i32
    %c0_i32_1 = arith.constant 0 : i32
    return %c0_i32, %c0_i32_0 : i32, i32
  }
  func.func @transform_5(%arg0: i32) -> (i32, i32) {
    %c0_i32 = arith.constant 0 : i32
    %c0_i32_0 = arith.constant 0 : i32
    %c0_i32_1 = arith.constant 0 : i32
    return %c0_i32, %c0_i32_0 : i32, i32
  }
  func.func @transform_6(%arg0: i32) -> (i32, i32) {
    %c0_i32 = arith.constant 0 : i32
    %c0_i32_0 = arith.constant 0 : i32
    %c0_i32_1 = arith.constant 0 : i32
    return %c0_i32, %c0_i32_0 : i32, i32
  }
  func.func @transform_7(%arg0: i32) -> (i32, i32) {
    %c0_i32 = arith.constant 0 : i32
    %c0_i32_0 = arith.constant 0 : i32
    return %arg0, %c0_i32 : i32, i32
  }
}

</mosaic_0001>

<llo_original>
// kernel: tpu_custom_call.1
$region0: #{tpu_custom_call.1}
  #allocation0 [shape = 'u32[]', space=smem, size = 0x4, offset = 0x4, fixed_abs, tag = 'smem constant byte address 0x4 - core index']
  #allocation1 [shape = 'u32[144,128]{1,0:T(1,128)}', space=vmem, size = 0x12000, scoped, tag = 'internal scratch']
  %s0 = inlined_call_operand.vmem [shape: f32[512,64], index: 0, kind: input, shape index: {}]
  %s1 = inlined_call_operand.vmem [shape: bf16[64,64], index: 1, kind: input, shape index: {}]
  %s2 = inlined_call_operand.vmem [shape: f32[1,64], index: 2, kind: input, shape index: {}]
  %s3 = inlined_call_operand.vmem [shape: bf16[64,64], index: 3, kind: input, shape index: {}]
  %s4 = inlined_call_operand.vmem [shape: f32[1,64], index: 4, kind: input, shape index: {}]
  %s5 = inlined_call_operand.vmem [shape: f32[1,64], index: 5, kind: input, shape index: {}]
  %s6 = inlined_call_operand.vmem [shape: f32[1,64], index: 6, kind: input, shape index: {}]
  %s7 = inlined_call_operand.vmem [shape: f32[512,64], index: 7, kind: output, shape index: {}]
  %s8 = sld [smem:[#allocation0]]
  $region61: #{tpu_custom_call.1} parent=0
    _
  %s10 = ssub.s32 1, %s8
  %s11 = scalar_select 0, %s10, %s8
  loop: start=0, step=1, limit=4
  $region2: #{tpu_custom_call.1} parent=0 // loop_pre_header
    _
  $region3: #{tpu_custom_call.1} parent=0 // loop_header
    %s13 = sphi 0, %s17
    %p14 = scmp.ge.s32.totalorder %s13, 4
    %s23 = sphi 0, %s25
    %s26 = sphi 0, %s23
    %s27 = sphi 0, %s26
    %s43 = sphi 0, %s27
    %s47 = sphi 0, %s47
    %s49 = sphi 0, %s47
    %s50 = sphi 0, %s49
    %s64 = sphi 0, %s50
    %s68 = sphi 0, %s68
    %s70 = sphi 0, %s68
    %s71 = sphi 0, %s70
    %s85 = sphi 0, %s71
    %s89 = sphi 0, %s89
    %s91 = sphi 0, %s89
    %s92 = sphi 0, %s91
    %s106 = sphi 0, %s92
    %s110 = sphi 0, %s110
    %s112 = sphi 0, %s110
    %s113 = sphi 0, %s112
    %s127 = sphi 0, %s113
    %s131 = sphi 0, %s131
    %s133 = sphi 0, %s131
    %s134 = sphi 0, %s133
    %s148 = sphi 0, %s134
    %s152 = sphi 0, %s152
    %s154 = sphi 0, %s152
    %s155 = sphi 0, %s154
    %s169 = sphi 0, %s155
    %s175 = sphi 0, %s177
    %s178 = sphi 0, %s175
    %s179 = sphi 0, %s178
    %s195 = sphi 0, %s179
  $region4: #{tpu_custom_call.1} parent=0 // loop_header_branch
    %16 = sbr.rel (%p14) target = $region8
  $region5: #{tpu_custom_call.1} parent=0 // loop_body
    %s18 = ssub.s32 %s13, 1
    %s19 = ssub.s32 %s13, 2
    %s20 = sadd.s32 %s13, 1
    %s21 = ssub.s32 %s13, %s20
    %p22 = scmp.eq.s32.totalorder %s21, 0
    %s24 = sadd.s32 %s23, 1
    %s25 = scalar_select %p22, %s23, %s24
    %p28 = pneg %p22
    %p29 = scmp.eq.s32.totalorder %s13, 1
    %p30 = por %p28, %p29
    %p31 = scmp.ne.s32.totalorder %s23, %s26
    %p32 = scmp.eq.s32.totalorder %s13, 0
    %p33 = por %p31, %p32
    %p34 = scmp.ne.s32.totalorder %s23, %s26
    %p35 = scmp.eq.s32.totalorder %s18, 1
    %p36 = por %p34, %p35
    %p37 = scmp.ne.s32.totalorder %s26, %s27
    %p38 = scmp.eq.s32.totalorder %s18, 0
    %p39 = por %p37, %p38
    %p40 = scmp.ne.s32.totalorder %s26, %s27
    %p41 = scmp.eq.s32.totalorder %s19, 1
    %p42 = por %p40, %p41
    %p44 = scmp.ne.s32.totalorder %s27, %s43
    %p45 = scmp.eq.s32.totalorder %s19, 0
    %p46 = por %p44, %p45
    %s48 = sadd.s32 %s47, 1
    %p51 = scmp.eq.s32.totalorder %s13, 1
    %p52 = scmp.ne.s32.totalorder %s47, %s49
    %p53 = scmp.eq.s32.totalorder %s13, 0
    %p54 = por %p52, %p53
    %p55 = scmp.ne.s32.totalorder %s47, %s49
    %p56 = scmp.eq.s32.totalorder %s18, 1
    %p57 = por %p55, %p56
    %p58 = scmp.ne.s32.totalorder %s49, %s50
    %p59 = scmp.eq.s32.totalorder %s18, 0
    %p60 = por %p58, %p59
    %p61 = scmp.ne.s32.totalorder %s49, %s50
    %p62 = scmp.eq.s32.totalorder %s19, 1
    %p63 = por %p61, %p62
    %p65 = scmp.ne.s32.totalorder %s50, %s64
    %p66 = scmp.eq.s32.totalorder %s19, 0
    %p67 = por %p65, %p66
    %s69 = sadd.s32 %s68, 1
    %p72 = scmp.eq.s32.totalorder %s13, 1
    %p73 = scmp.ne.s32.totalorder %s68, %s70
    %p74 = scmp.eq.s32.totalorder %s13, 0
    %p75 = por %p73, %p74
    %p76 = scmp.ne.s32.totalorder %s68, %s70
    %p77 = scmp.eq.s32.totalorder %s18, 1
    %p78 = por %p76, %p77
    %p79 = scmp.ne.s32.totalorder %s70, %s71
    %p80 = scmp.eq.s32.totalorder %s18, 0
    %p81 = por %p79, %p80
    %p82 = scmp.ne.s32.totalorder %s70, %s71
    %p83 = scmp.eq.s32.totalorder %s19, 1
    %p84 = por %p82, %p83
    %p86 = scmp.ne.s32.totalorder %s71, %s85
    %p87 = scmp.eq.s32.totalorder %s19, 0
    %p88 = por %p86, %p87
    %s90 = sadd.s32 %s89, 1
    %p93 = scmp.eq.s32.totalorder %s13, 1
    %p94 = scmp.ne.s32.totalorder %s89, %s91
    %p95 = scmp.eq.s32.totalorder %s13, 0
    %p96 = por %p94, %p95
    %p97 = scmp.ne.s32.totalorder %s89, %s91
    %p98 = scmp.eq.s32.totalorder %s18, 1
    %p99 = por %p97, %p98
    %p100 = scmp.ne.s32.totalorder %s91, %s92
    %p101 = scmp.eq.s32.totalorder %s18, 0
    %p102 = por %p100, %p101
    %p103 = scmp.ne.s32.totalorder %s91, %s92
    %p104 = scmp.eq.s32.totalorder %s19, 1
    %p105 = por %p103, %p104
    %p107 = scmp.ne.s32.totalorder %s92, %s106
    %p108 = scmp.eq.s32.totalorder %s19, 0
    %p109 = por %p107, %p108
    %s111 = sadd.s32 %s110, 1
    %p114 = scmp.eq.s32.totalorder %s13, 1
    %p115 = scmp.ne.s32.totalorder %s110, %s112
    %p116 = scmp.eq.s32.totalorder %s13, 0
    %p117 = por %p115, %p116
    %p118 = scmp.ne.s32.totalorder %s110, %s112
    %p119 = scmp.eq.s32.totalorder %s18, 1
    %p120 = por %p118, %p119
    %p121 = scmp.ne.s32.totalorder %s112, %s113
    %p122 = scmp.eq.s32.totalorder %s18, 0
    %p123 = por %p121, %p122
    %p124 = scmp.ne.s32.totalorder %s112, %s113
    %p125 = scmp.eq.s32.totalorder %s19, 1
    %p126 = por %p124, %p125
    %p128 = scmp.ne.s32.totalorder %s113, %s127
    %p129 = scmp.eq.s32.totalorder %s19, 0
    %p130 = por %p128, %p129
    %s132 = sadd.s32 %s131, 1
    %p135 = scmp.eq.s32.totalorder %s13, 1
    %p136 = scmp.ne.s32.totalorder %s131, %s133
    %p137 = scmp.eq.s32.totalorder %s13, 0
    %p138 = por %p136, %p137
    %p139 = scmp.ne.s32.totalorder %s131, %s133
    %p140 = scmp.eq.s32.totalorder %s18, 1
    %p141 = por %p139, %p140
    %p142 = scmp.ne.s32.totalorder %s133, %s134
    %p143 = scmp.eq.s32.totalorder %s18, 0
    %p144 = por %p142, %p143
    %p145 = scmp.ne.s32.totalorder %s133, %s134
    %p146 = scmp.eq.s32.totalorder %s19, 1
    %p147 = por %p145, %p146
    %p149 = scmp.ne.s32.totalorder %s134, %s148
    %p150 = scmp.eq.s32.totalorder %s19, 0
    %p151 = por %p149, %p150
    %s153 = sadd.s32 %s152, 1
    %p156 = scmp.eq.s32.totalorder %s13, 1
    %p157 = scmp.ne.s32.totalorder %s152, %s154
    %p158 = scmp.eq.s32.totalorder %s13, 0
    %p159 = por %p157, %p158
    %p160 = scmp.ne.s32.totalorder %s152, %s154
    %p161 = scmp.eq.s32.totalorder %s18, 1
    %p162 = por %p160, %p161
    %p163 = scmp.ne.s32.totalorder %s154, %s155
    %p164 = scmp.eq.s32.totalorder %s18, 0
    %p165 = por %p163, %p164
    %p166 = scmp.ne.s32.totalorder %s154, %s155
    %p167 = scmp.eq.s32.totalorder %s19, 1
    %p168 = por %p166, %p167
    %p170 = scmp.ne.s32.totalorder %s155, %s169
    %p171 = scmp.eq.s32.totalorder %s19, 0
    %p172 = por %p170, %p171
    %s173 = ssub.s32 %s13, %s20
    %p174 = scmp.eq.s32.totalorder %s173, 0
    %s176 = sadd.s32 %s175, 1
    %s177 = scalar_select %p174, %s175, %s176
    %p180 = pneg %p174
    %p181 = scmp.eq.s32.totalorder %s13, 1
    %p182 = por %p180, %p181
    %p183 = scmp.ne.s32.totalorder %s175, %s178
    %p184 = scmp.eq.s32.totalorder %s13, 0
    %p185 = por %p183, %p184
    %p186 = scmp.ne.s32.totalorder %s175, %s178
    %p187 = scmp.eq.s32.totalorder %s18, 1
    %p188 = por %p186, %p187
    %p189 = scmp.ne.s32.totalorder %s178, %s179
    %p190 = scmp.eq.s32.totalorder %s18, 0
    %p191 = por %p189, %p190
    %p192 = scmp.ne.s32.totalorder %s178, %s179
    %p193 = scmp.eq.s32.totalorder %s19, 1
    %p194 = por %p192, %p193
    %p196 = scmp.ne.s32.totalorder %s179, %s195
    %p197 = scmp.eq.s32.totalorder %s19, 0
    %p198 = por %p196, %p197
    %p199 = scmp.le.s32.totalorder 1, %s13
    %p200 = scmp.lt.s32.totalorder %s13, 3
    %p201 = pnand %p199, %p200
    %p202 = pneg %p201
    // Predicated region
    $region9: #{tpu_custom_call.1} parent=5 // pred_check
      _
    $region10: #{tpu_custom_call.1} parent=5 // pred_check_branch
      %204 = sbr.rel (%p201) target = $region12
    $region11: #{tpu_custom_call.1} parent=5 // pred_region
      %s205 = ssub.s32 %s13, 1
      // Predicated region
      $region13: #{tpu_custom_call.1} parent=11 // pred_check
        %p206 = pneg %p60
      $region14: #{tpu_custom_call.1} parent=11 // pred_check_branch
        %208 = sbr.rel (%p206) target = $region16
      $region15: #{tpu_custom_call.1} parent=11 // pred_region
        _
      $region16: #{tpu_custom_call.1} parent=11 // pred_fallthru
        _
      // Predicated region
      $region17: #{tpu_custom_call.1} parent=11 // pred_check
        %p209 = pneg %p81
      $region18: #{tpu_custom_call.1} parent=11 // pred_check_branch
        %211 = sbr.rel (%p209) target = $region20
      $region19: #{tpu_custom_call.1} parent=11 // pred_region
        _
      $region20: #{tpu_custom_call.1} parent=11 // pred_fallthru
        _
      // Predicated region
      $region21: #{tpu_custom_call.1} parent=11 // pred_check
        %p212 = pneg %p102
      $region22: #{tpu_custom_call.1} parent=11 // pred_check_branch
        %214 = sbr.rel (%p212) target = $region24
      $region23: #{tpu_custom_call.1} parent=11 // pred_region
        _
      $region24: #{tpu_custom_call.1} parent=11 // pred_fallthru
        _
      // Predicated region
      $region25: #{tpu_custom_call.1} parent=11 // pred_check
        %p215 = pneg %p123
      $region26: #{tpu_custom_call.1} parent=11 // pred_check_branch
        %217 = sbr.rel (%p215) target = $region28
      $region27: #{tpu_custom_call.1} parent=11 // pred_region
        _
      $region28: #{tpu_custom_call.1} parent=11 // pred_fallthru
        _
      // Predicated region
      $region29: #{tpu_custom_call.1} parent=11 // pred_check
        %p218 = pneg %p144
      $region30: #{tpu_custom_call.1} parent=11 // pred_check_branch
        %220 = sbr.rel (%p218) target = $region32
      $region31: #{tpu_custom_call.1} parent=11 // pred_region
        _
      $region32: #{tpu_custom_call.1} parent=11 // pred_fallthru
        _
      // Predicated region
      $region33: #{tpu_custom_call.1} parent=11 // pred_check
        %p221 = pneg %p165
      $region34: #{tpu_custom_call.1} parent=11 // pred_check_branch
        %223 = sbr.rel (%p221) target = $region36
      $region35: #{tpu_custom_call.1} parent=11 // pred_region
        _
      $region36: #{tpu_custom_call.1} parent=11 // pred_fallthru
        _
    $region12: #{tpu_custom_call.1} parent=5 // pred_fallthru
      _
    %p224 = scmp.lt.s32.totalorder %s13, 2
    // Predicated region
    $region37: #{tpu_custom_call.1} parent=5 // pred_check
      %p225 = pneg %p224
    $region38: #{tpu_custom_call.1} parent=5 // pred_check_branch
      %227 = sbr.rel (%p225) target = $region40
    $region39: #{tpu_custom_call.1} parent=5 // pred_region
      // Predicated region
      $region41: #{tpu_custom_call.1} parent=39 // pred_check
        %p228 = pneg %p33
      $region42: #{tpu_custom_call.1} parent=39 // pred_check_branch
        %230 = sbr.rel (%p228) target = $region44
      $region43: #{tpu_custom_call.1} parent=39 // pred_region
        %s231 = smul.u32 32, %s13
        %p232 = scmp.lt.s32.totalorder %s231, 63
        %s233 = scalar_select %p232, %s231, 63
        %s234 = smul.addr %s233, 8
        %s235 = scalar_lea.vmem %s0, %s234
        %s236 = smul.u32 32, %s13
      $region44: #{tpu_custom_call.1} parent=39 // pred_fallthru
        _
    $region40: #{tpu_custom_call.1} parent=5 // pred_fallthru
      _
    %p237 = scmp.le.s32.totalorder 1, %s13
    %p238 = scmp.lt.s32.totalorder %s13, 3
    %p239 = pnand %p237, %p238
    %p240 = pneg %p239
    // Predicated region
    $region45: #{tpu_custom_call.1} parent=5 // pred_check
      _
    $region46: #{tpu_custom_call.1} parent=5 // pred_check_branch
      %242 = sbr.rel (%p239) target = $region48
    $region47: #{tpu_custom_call.1} parent=5 // pred_region
      %s243 = ssub.s32 %s13, 1
      %s244 = smul.u32 32, %s18
      %p245 = scmp.lt.s32.totalorder %s244, 63
      %s246 = scalar_select %p245, %s244, 63
      %s247 = smul.addr %s246, 8
      %s248 = scalar_lea.vmem %s0, %s247
      %p249 = pneg %p39
      %p250 = pneg %p36
      %p251 = pneg %p60
      %p252 = pneg %p57
      %p253 = pneg %p81
      %p254 = pneg %p78
      %p255 = pneg %p102
      %p256 = pneg %p99
      %p257 = pneg %p123
      %p258 = pneg %p120
      %p259 = pneg %p144
      %p260 = pneg %p141
      %p261 = pneg %p165
      %p262 = pneg %p162
      %p263 = pneg %p191
      %p264 = pneg %p188
      %s265 = smul.u32 32, %s18
      %p266 = scmp.lt.s32.totalorder %s265, 63
      %s267 = scalar_select %p266, %s265, 63
      %s268 = smul.addr %s267, 8
      %s269 = scalar_lea.vmem %s7, %s268
      %s270 = smul.u32 32, %s18
      %p271 = scmp.lt.s32.totalorder %s270, 63
      %s272 = scalar_select %p271, %s270, 63
      %s273 = smul.addr %s272, 8
      %s274 = scalar_lea.vmem %s0, %s273
      %s275 = smul.u32 32, %s18
      %s276 = smul.u32 32, %s18
      %p277 = scmp.lt.s32.totalorder %s276, 63
      %s278 = scalar_select %p277, %s276, 63
      %s279 = smul.addr %s278, 8
      %s280 = scalar_lea.vmem %s7, %s279
      %s281 = smul.u32 32, %s18
      %v283 = vld [vmem:[%s274] sm:$0xff]
      %v284 = vld [vmem:[%s274 + $0x8] sm:$0xff]
      %v285 = vld [vmem:[%s274 + $0x10] sm:$0xff]
      %v286 = vld [vmem:[%s274 + $0x18] sm:$0xff]
      %v287 = vld [vmem:[%s274 + $0x20] sm:$0xff]
      %v288 = vld [vmem:[%s274 + $0x28] sm:$0xff]
      %v289 = vld [vmem:[%s274 + $0x30] sm:$0xff]
      %v290 = vld [vmem:[%s274 + $0x38] sm:$0xff]
      %v291 = vld [vmem:[%s274 + $0x40] sm:$0xff]
      %v292 = vld [vmem:[%s274 + $0x48] sm:$0xff]
      %v293 = vld [vmem:[%s274 + $0x50] sm:$0xff]
      %v294 = vld [vmem:[%s274 + $0x58] sm:$0xff]
      %v295 = vld [vmem:[%s274 + $0x60] sm:$0xff]
      %v296 = vld [vmem:[%s274 + $0x68] sm:$0xff]
      %v297 = vld [vmem:[%s274 + $0x70] sm:$0xff]
      %v298 = vld [vmem:[%s274 + $0x78] sm:$0xff]
      %v299 = vld [vmem:[%s274 + $0x80] sm:$0xff]
      %v300 = vld [vmem:[%s274 + $0x88] sm:$0xff]
      %v301 = vld [vmem:[%s274 + $0x90] sm:$0xff]
      %v302 = vld [vmem:[%s274 + $0x98] sm:$0xff]
      %v303 = vld [vmem:[%s274 + $0xa0] sm:$0xff]
      %v304 = vld [vmem:[%s274 + $0xa8] sm:$0xff]
      %v305 = vld [vmem:[%s274 + $0xb0] sm:$0xff]
      %v306 = vld [vmem:[%s274 + $0xb8] sm:$0xff]
      %v307 = vld [vmem:[%s274 + $0xc0] sm:$0xff]
      %v308 = vld [vmem:[%s274 + $0xc8] sm:$0xff]
      %v309 = vld [vmem:[%s274 + $0xd0] sm:$0xff]
      %v310 = vld [vmem:[%s274 + $0xd8] sm:$0xff]
      %v311 = vld [vmem:[%s274 + $0xe0] sm:$0xff]
      %v312 = vld [vmem:[%s274 + $0xe8] sm:$0xff]
      %v313 = vld [vmem:[%s274 + $0xf0] sm:$0xff]
      %v314 = vld [vmem:[%s274 + $0xf8] sm:$0xff]
      %v315 = vpack.c.bf16 %v284, %v283
      %v316 = vpack.c.bf16 %v286, %v285
      %v317 = vpack.c.bf16 %v288, %v287
      %v318 = vpack.c.bf16 %v290, %v289
      %v319 = vpack.c.bf16 %v292, %v291
      %v320 = vpack.c.bf16 %v294, %v293
      %v321 = vpack.c.bf16 %v296, %v295
      %v322 = vpack.c.bf16 %v298, %v297
      %v323 = vpack.c.bf16 %v300, %v299
      %v324 = vpack.c.bf16 %v302, %v301
      %v325 = vpack.c.bf16 %v304, %v303
      %v326 = vpack.c.bf16 %v306, %v305
      %v327 = vpack.c.bf16 %v308, %v307
      %v328 = vpack.c.bf16 %v310, %v309
      %v329 = vpack.c.bf16 %v312, %v311
      %v330 = vpack.c.bf16 %v314, %v313
      %v331 = vld [vmem:[%s1] sm:$0xf]
      %v332 = vld [vmem:[%s1 + $0x4] sm:$0xf]
      %v333 = vld [vmem:[%s1 + $0x8] sm:$0xf]
      %v334 = vld [vmem:[%s1 + $0xc] sm:$0xf]
      %v335 = vld [vmem:[%s1 + $0x10] sm:$0xf]
      %v336 = vld [vmem:[%s1 + $0x14] sm:$0xf]
      %v337 = vld [vmem:[%s1 + $0x18] sm:$0xf]
      %v338 = vld [vmem:[%s1 + $0x1c] sm:$0xf]
      %v339 = vld [vmem:[%s2] sm:$0x1]
      %v341 = vlaneseq
      %v342 = vshrl.u32 %v341, 7
      %v343 = vsub.s32 0, %v342
      %v344 = vrot.slane %v339, %v343
      %v354 = vunpack.c.l.b16 %v331
      %v355 = vunpack.c.l.b16 %v332
      %v356 = vunpack.c.l.b16 %v333
      %v357 = vunpack.c.l.b16 %v334
      %v358 = vunpack.c.l.b16 %v335
      %v359 = vunpack.c.l.b16 %v336
      %v360 = vunpack.c.l.b16 %v337
      %v361 = vunpack.c.l.b16 %v338
      %v362 = vpack.c.b16 %v355, %v354
      %v363 = vpack.c.b16 %v357, %v356
      %v364 = vpack.c.b16 %v359, %v358
      %v365 = vpack.c.b16 %v361, %v360
      %vm370 = vcmask 523264
      %v372 = vsel %vm370, %v315, 0
      %v375 = vsel %vm370, %v316, 0
      %v378 = vsel %vm370, %v317, 0
      %v381 = vsel %vm370, %v318, 0
      %v384 = vsel %vm370, %v319, 0
      %v387 = vsel %vm370, %v320, 0
      %v390 = vsel %vm370, %v321, 0
      %v393 = vsel %vm370, %v322, 0
      %v396 = vsel %vm370, %v323, 0
      %v399 = vsel %vm370, %v324, 0
      %v402 = vsel %vm370, %v325, 0
      %v405 = vsel %vm370, %v326, 0
      %v408 = vsel %vm370, %v327, 0
      %v411 = vsel %vm370, %v328, 0
      %v414 = vsel %vm370, %v329, 0
      %v417 = vsel %vm370, %v330, 0
      %419 = vmatprep.subr.bf16.mxu0 0
      %420 = vmatpush1.bf16.msra.mxu0 0
      %421 = vmatprep.subr.bf16.mxu0 0
      %422 = vmatpush1.bf16.msra.mxu0 0
      %423 = vmatprep.subr.bf16.mxu0 0
      %424 = vmatpush1.bf16.msra.mxu0 0
      %425 = vmatprep.subr.bf16.mxu0 0
      %426 = vmatpush1.bf16.msra.mxu0 0
      %427 = vmatprep.subr.bf16.mxu0 0
      %428 = vmatpush1.bf16.msra.mxu0 %v365
      %429 = vmatprep.subr.bf16.mxu0 0
      %430 = vmatpush1.bf16.msra.mxu0 %v364
      %431 = vmatprep.subr.bf16.mxu0 0
      %432 = vmatpush1.bf16.msra.mxu0 %v363
      %433 = vmatprep.subr.bf16.mxu0 0
      %434 = vmatpush1.bf16.msra.mxu0 %v362
      %435 = vmatprep.subr.bf16.mxu0 0
      %436 = vmatpush2.bf16.msra.mxu0 0
      %437 = vmatprep.subr.bf16.mxu0 0
      %438 = vmatpush2.bf16.msra.mxu0 0
      %439 = vmatprep.subr.bf16.mxu0 0
      %440 = vmatpush2.bf16.msra.mxu0 0
      %441 = vmatprep.subr.bf16.mxu0 0
      %442 = vmatpush2.bf16.msra.mxu0 0
      %443 = vmatprep.subr.bf16.mxu0 0
      %444 = vmatpush2.bf16.msra.mxu0 0
      %445 = vmatprep.subr.bf16.mxu0 0
      %446 = vmatpush2.bf16.msra.mxu0 0
      %447 = vmatprep.subr.bf16.mxu0 0
      %448 = vmatpush2.bf16.msra.mxu0 0
      %449 = vmatprep.subr.bf16.mxu0 0
      %450 = vmatpush2.bf16.msra.mxu0 0
      %451 = vmatprep.mubr.bf16.mxu0 0
      %452 = vmatmul.mubr.bf16.gmra.mxu0 %v372
      %v453 = vpop.f32.mrf.mxu0
      %v454 = vadd.f32 %v344, %v453
      %v455 = vpop.f32.mrf.mxu0
      %v456 = vpop.f32.mrf.mxu0
      %v457 = vadd.f32 %v344, %v456
      %v458 = vpop.f32.mrf.mxu0
      %459 = vmatprep.mubr.bf16.mxu0 0
      %460 = vmatmul.mubr.bf16.gmra.mxu0 %v375
      %v461 = vpop.f32.mrf.mxu0
      %v462 = vadd.f32 %v344, %v461
      %v463 = vpop.f32.mrf.mxu0
      %v464 = vpop.f32.mrf.mxu0
      %v465 = vadd.f32 %v344, %v464
      %v466 = vpop.f32.mrf.mxu0
      %467 = vmatprep.mubr.bf16.mxu0 0
      %468 = vmatmul.mubr.bf16.gmra.mxu0 %v378
      %v469 = vpop.f32.mrf.mxu0
      %v470 = vadd.f32 %v344, %v469
      %v471 = vpop.f32.mrf.mxu0
      %v472 = vpop.f32.mrf.mxu0
      %v473 = vadd.f32 %v344, %v472
      %v474 = vpop.f32.mrf.mxu0
      %475 = vmatprep.mubr.bf16.mxu0 0
      %476 = vmatmul.mubr.bf16.gmra.mxu0 %v381
      %v477 = vpop.f32.mrf.mxu0
      %v478 = vadd.f32 %v344, %v477
      %v479 = vpop.f32.mrf.mxu0
      %v480 = vpop.f32.mrf.mxu0
      %v481 = vadd.f32 %v344, %v480
      %v482 = vpop.f32.mrf.mxu0
      %483 = vmatprep.mubr.bf16.mxu0 0
      %484 = vmatmul.mubr.bf16.gmra.mxu0 %v384
      %v485 = vpop.f32.mrf.mxu0
      %v486 = vadd.f32 %v344, %v485
      %v487 = vpop.f32.mrf.mxu0
      %v488 = vpop.f32.mrf.mxu0
      %v489 = vadd.f32 %v344, %v488
      %v490 = vpop.f32.mrf.mxu0
      %491 = vmatprep.mubr.bf16.mxu0 0
      %492 = vmatmul.mubr.bf16.gmra.mxu0 %v387
      %v493 = vpop.f32.mrf.mxu0
      %v494 = vadd.f32 %v344, %v493
      %v495 = vpop.f32.mrf.mxu0
      %v496 = vpop.f32.mrf.mxu0
      %v497 = vadd.f32 %v344, %v496
      %v498 = vpop.f32.mrf.mxu0
      %499 = vmatprep.mubr.bf16.mxu0 0
      %500 = vmatmul.mubr.bf16.gmra.mxu0 %v390
      %v501 = vpop.f32.mrf.mxu0
      %v502 = vadd.f32 %v344, %v501
      %v503 = vpop.f32.mrf.mxu0
      %v504 = vpop.f32.mrf.mxu0
      %v505 = vadd.f32 %v344, %v504
      %v506 = vpop.f32.mrf.mxu0
      %507 = vmatprep.mubr.bf16.mxu0 0
      %508 = vmatmul.mubr.bf16.gmra.mxu0 %v393
      %v509 = vpop.f32.mrf.mxu0
      %v510 = vadd.f32 %v344, %v509
      %v511 = vpop.f32.mrf.mxu0
      %v512 = vpop.f32.mrf.mxu0
      %v513 = vadd.f32 %v344, %v512
      %v514 = vpop.f32.mrf.mxu0
      %515 = vmatprep.mubr.bf16.mxu0 0
      %516 = vmatmul.mubr.bf16.gmra.mxu0 %v396
      %v517 = vpop.f32.mrf.mxu0
      %v518 = vadd.f32 %v344, %v517
      %v519 = vpop.f32.mrf.mxu0
      %v520 = vpop.f32.mrf.mxu0
      %v521 = vadd.f32 %v344, %v520
      %v522 = vpop.f32.mrf.mxu0
      %523 = vmatprep.mubr.bf16.mxu0 0
      %524 = vmatmul.mubr.bf16.gmra.mxu0 %v399
      %v525 = vpop.f32.mrf.mxu0
      %v526 = vadd.f32 %v344, %v525
      %v527 = vpop.f32.mrf.mxu0
      %v528 = vpop.f32.mrf.mxu0
      %v529 = vadd.f32 %v344, %v528
      %v530 = vpop.f32.mrf.mxu0
      %531 = vmatprep.mubr.bf16.mxu0 0
      %532 = vmatmul.mubr.bf16.gmra.mxu0 %v402
      %v533 = vpop.f32.mrf.mxu0
      %v534 = vadd.f32 %v344, %v533
      %v535 = vpop.f32.mrf.mxu0
      %v536 = vpop.f32.mrf.mxu0
      %v537 = vadd.f32 %v344, %v536
      %v538 = vpop.f32.mrf.mxu0
      %539 = vmatprep.mubr.bf16.mxu0 0
      %540 = vmatmul.mubr.bf16.gmra.mxu0 %v405
      %v541 = vpop.f32.mrf.mxu0
      %v542 = vadd.f32 %v344, %v541
      %v543 = vpop.f32.mrf.mxu0
      %v544 = vpop.f32.mrf.mxu0
      %v545 = vadd.f32 %v344, %v544
      %v546 = vpop.f32.mrf.mxu0
      %547 = vmatprep.mubr.bf16.mxu0 0
      %548 = vmatmul.mubr.bf16.gmra.mxu0 %v408
      %v549 = vpop.f32.mrf.mxu0
      %v550 = vadd.f32 %v344, %v549
      %v551 = vpop.f32.mrf.mxu0
      %v552 = vpop.f32.mrf.mxu0
      %v553 = vadd.f32 %v344, %v552
      %v554 = vpop.f32.mrf.mxu0
      %555 = vmatprep.mubr.bf16.mxu0 0
      %556 = vmatmul.mubr.bf16.gmra.mxu0 %v411
      %v557 = vpop.f32.mrf.mxu0
      %v558 = vadd.f32 %v344, %v557
      %v559 = vpop.f32.mrf.mxu0
      %v560 = vpop.f32.mrf.mxu0
      %v561 = vadd.f32 %v344, %v560
      %v562 = vpop.f32.mrf.mxu0
      %563 = vmatprep.mubr.bf16.mxu0 0
      %564 = vmatmul.mubr.bf16.gmra.mxu0 %v414
      %v565 = vpop.f32.mrf.mxu0
      %v566 = vadd.f32 %v344, %v565
      %v567 = vpop.f32.mrf.mxu0
      %v568 = vpop.f32.mrf.mxu0
      %v569 = vadd.f32 %v344, %v568
      %v570 = vpop.f32.mrf.mxu0
      %571 = vmatprep.mubr.bf16.mxu0 0
      %572 = vmatmul.mubr.bf16.gmra.mxu0 %v417
      %v573 = vpop.f32.mrf.mxu0
      %v574 = vadd.f32 %v344, %v573
      %v575 = vpop.f32.mrf.mxu0
      %v576 = vpop.f32.mrf.mxu0
      %v577 = vadd.f32 %v344, %v576
      %v578 = vpop.f32.mrf.mxu0
      %579 = vdwg.mxu0
      %v580 = vmax.f32 %v454, 0.0
      %v581 = vmax.f32 %v457, 0.0
      %v582 = vmax.f32 %v462, 0.0
      %v583 = vmax.f32 %v465, 0.0
      %v584 = vmax.f32 %v470, 0.0
      %v585 = vmax.f32 %v473, 0.0
      %v586 = vmax.f32 %v478, 0.0
      %v587 = vmax.f32 %v481, 0.0
      %v588 = vmax.f32 %v486, 0.0
      %v589 = vmax.f32 %v489, 0.0
      %v590 = vmax.f32 %v494, 0.0
      %v591 = vmax.f32 %v497, 0.0
      %v592 = vmax.f32 %v502, 0.0
      %v593 = vmax.f32 %v505, 0.0
      %v594 = vmax.f32 %v510, 0.0
      %v595 = vmax.f32 %v513, 0.0
      %v596 = vmax.f32 %v518, 0.0
      %v597 = vmax.f32 %v521, 0.0
      %v598 = vmax.f32 %v526, 0.0
      %v599 = vmax.f32 %v529, 0.0
      %v600 = vmax.f32 %v534, 0.0
      %v601 = vmax.f32 %v537, 0.0
      %v602 = vmax.f32 %v542, 0.0
      %v603 = vmax.f32 %v545, 0.0
      %v604 = vmax.f32 %v550, 0.0
      %v605 = vmax.f32 %v553, 0.0
      %v606 = vmax.f32 %v558, 0.0
      %v607 = vmax.f32 %v561, 0.0
      %v608 = vmax.f32 %v566, 0.0
      %v609 = vmax.f32 %v569, 0.0
      %v610 = vmax.f32 %v574, 0.0
      %v611 = vmax.f32 %v577, 0.0
      %v612 = vpack.c.bf16 %v581, %v580
      %v613 = vpack.c.bf16 %v583, %v582
      %v614 = vpack.c.bf16 %v585, %v584
      %v615 = vpack.c.bf16 %v587, %v586
      %v616 = vpack.c.bf16 %v589, %v588
      %v617 = vpack.c.bf16 %v591, %v590
      %v618 = vpack.c.bf16 %v593, %v592
      %v619 = vpack.c.bf16 %v595, %v594
      %v620 = vpack.c.bf16 %v597, %v596
      %v621 = vpack.c.bf16 %v599, %v598
      %v622 = vpack.c.bf16 %v601, %v600
      %v623 = vpack.c.bf16 %v603, %v602
      %v624 = vpack.c.bf16 %v605, %v604
      %v625 = vpack.c.bf16 %v607, %v606
      %v626 = vpack.c.bf16 %v609, %v608
      %v627 = vpack.c.bf16 %v611, %v610
      %v628 = vld [vmem:[%s3] sm:$0xf]
      %v629 = vld [vmem:[%s3 + $0x4] sm:$0xf]
      %v630 = vld [vmem:[%s3 + $0x8] sm:$0xf]
      %v631 = vld [vmem:[%s3 + $0xc] sm:$0xf]
      %v632 = vld [vmem:[%s3 + $0x10] sm:$0xf]
      %v633 = vld [vmem:[%s3 + $0x14] sm:$0xf]
      %v634 = vld [vmem:[%s3 + $0x18] sm:$0xf]
      %v635 = vld [vmem:[%s3 + $0x1c] sm:$0xf]
      %v636 = vld [vmem:[%s4] sm:$0x1]
      %v638 = vlaneseq
      %v639 = vshrl.u32 %v638, 7
      %v640 = vsub.s32 0, %v639
      %v641 = vrot.slane %v636, %v640
      %v651 = vunpack.c.l.b16 %v628
      %v652 = vunpack.c.l.b16 %v629
      %v653 = vunpack.c.l.b16 %v630
      %v654 = vunpack.c.l.b16 %v631
      %v655 = vunpack.c.l.b16 %v632
      %v656 = vunpack.c.l.b16 %v633
      %v657 = vunpack.c.l.b16 %v634
      %v658 = vunpack.c.l.b16 %v635
      %v659 = vpack.c.b16 %v652, %v651
      %v660 = vpack.c.b16 %v654, %v653
      %v661 = vpack.c.b16 %v656, %v655
      %v662 = vpack.c.b16 %v658, %v657
      %v668 = vsel %vm370, %v612, 0
      %v671 = vsel %vm370, %v613, 0
      %v674 = vsel %vm370, %v614, 0
      %v677 = vsel %vm370, %v615, 0
      %v680 = vsel %vm370, %v616, 0
      %v683 = vsel %vm370, %v617, 0
      %v686 = vsel %vm370, %v618, 0
      %v689 = vsel %vm370, %v619, 0
      %v692 = vsel %vm370, %v620, 0
      %v695 = vsel %vm370, %v621, 0
      %v698 = vsel %vm370, %v622, 0
      %v701 = vsel %vm370, %v623, 0
      %v704 = vsel %vm370, %v624, 0
      %v707 = vsel %vm370, %v625, 0
      %v710 = vsel %vm370, %v626, 0
      %v713 = vsel %vm370, %v627, 0
      %715 = vmatprep.subr.bf16.mxu0 0
      %716 = vmatpush1.bf16.msra.mxu0 0
      %717 = vmatprep.subr.bf16.mxu0 0
      %718 = vmatpush1.bf16.msra.mxu0 0
      %719 = vmatprep.subr.bf16.mxu0 0
      %720 = vmatpush1.bf16.msra.mxu0 0
      %721 = vmatprep.subr.bf16.mxu0 0
      %722 = vmatpush1.bf16.msra.mxu0 0
      %723 = vmatprep.subr.bf16.mxu0 0
      %724 = vmatpush1.bf16.msra.mxu0 %v662
      %725 = vmatprep.subr.bf16.mxu0 0
      %726 = vmatpush1.bf16.msra.mxu0 %v661
      %727 = vmatprep.subr.bf16.mxu0 0
      %728 = vmatpush1.bf16.msra.mxu0 %v660
      %729 = vmatprep.subr.bf16.mxu0 0
      %730 = vmatpush1.bf16.msra.mxu0 %v659
      %731 = vmatprep.subr.bf16.mxu0 0
      %732 = vmatpush2.bf16.msra.mxu0 0
      %733 = vmatprep.subr.bf16.mxu0 0
      %734 = vmatpush2.bf16.msra.mxu0 0
      %735 = vmatprep.subr.bf16.mxu0 0
      %736 = vmatpush2.bf16.msra.mxu0 0
      %737 = vmatprep.subr.bf16.mxu0 0
      %738 = vmatpush2.bf16.msra.mxu0 0
      %739 = vmatprep.subr.bf16.mxu0 0
      %740 = vmatpush2.bf16.msra.mxu0 0
      %741 = vmatprep.subr.bf16.mxu0 0
      %742 = vmatpush2.bf16.msra.mxu0 0
      %743 = vmatprep.subr.bf16.mxu0 0
      %744 = vmatpush2.bf16.msra.mxu0 0
      %745 = vmatprep.subr.bf16.mxu0 0
      %746 = vmatpush2.bf16.msra.mxu0 0
      %747 = vmatprep.mubr.bf16.mxu0 0
      %748 = vmatmul.mubr.bf16.gmra.mxu0 %v668
      %v749 = vpop.f32.mrf.mxu0
      %v750 = vadd.f32 %v641, %v749
      %v751 = vpop.f32.mrf.mxu0
      %v752 = vpop.f32.mrf.mxu0
      %v753 = vadd.f32 %v641, %v752
      %v754 = vpop.f32.mrf.mxu0
      %755 = vmatprep.mubr.bf16.mxu0 0
      %756 = vmatmul.mubr.bf16.gmra.mxu0 %v671
      %v757 = vpop.f32.mrf.mxu0
      %v758 = vadd.f32 %v641, %v757
      %v759 = vpop.f32.mrf.mxu0
      %v760 = vpop.f32.mrf.mxu0
      %v761 = vadd.f32 %v641, %v760
      %v762 = vpop.f32.mrf.mxu0
      %763 = vmatprep.mubr.bf16.mxu0 0
      %764 = vmatmul.mubr.bf16.gmra.mxu0 %v674
      %v765 = vpop.f32.mrf.mxu0
      %v766 = vadd.f32 %v641, %v765
      %v767 = vpop.f32.mrf.mxu0
      %v768 = vpop.f32.mrf.mxu0
      %v769 = vadd.f32 %v641, %v768
      %v770 = vpop.f32.mrf.mxu0
      %771 = vmatprep.mubr.bf16.mxu0 0
      %772 = vmatmul.mubr.bf16.gmra.mxu0 %v677
      %v773 = vpop.f32.mrf.mxu0
      %v774 = vadd.f32 %v641, %v773
      %v775 = vpop.f32.mrf.mxu0
      %v776 = vpop.f32.mrf.mxu0
      %v777 = vadd.f32 %v641, %v776
      %v778 = vpop.f32.mrf.mxu0
      %779 = vmatprep.mubr.bf16.mxu0 0
      %780 = vmatmul.mubr.bf16.gmra.mxu0 %v680
      %v781 = vpop.f32.mrf.mxu0
      %v782 = vadd.f32 %v641, %v781
      %v783 = vpop.f32.mrf.mxu0
      %v784 = vpop.f32.mrf.mxu0
      %v785 = vadd.f32 %v641, %v784
      %v786 = vpop.f32.mrf.mxu0
      %787 = vmatprep.mubr.bf16.mxu0 0
      %788 = vmatmul.mubr.bf16.gmra.mxu0 %v683
      %v789 = vpop.f32.mrf.mxu0
      %v790 = vadd.f32 %v641, %v789
      %v791 = vpop.f32.mrf.mxu0
      %v792 = vpop.f32.mrf.mxu0
      %v793 = vadd.f32 %v641, %v792
      %v794 = vpop.f32.mrf.mxu0
      %795 = vmatprep.mubr.bf16.mxu0 0
      %796 = vmatmul.mubr.bf16.gmra.mxu0 %v686
      %v797 = vpop.f32.mrf.mxu0
      %v798 = vadd.f32 %v641, %v797
      %v799 = vpop.f32.mrf.mxu0
      %v800 = vpop.f32.mrf.mxu0
      %v801 = vadd.f32 %v641, %v800
      %v802 = vpop.f32.mrf.mxu0
      %803 = vmatprep.mubr.bf16.mxu0 0
      %804 = vmatmul.mubr.bf16.gmra.mxu0 %v689
      %v805 = vpop.f32.mrf.mxu0
      %v806 = vadd.f32 %v641, %v805
      %v807 = vpop.f32.mrf.mxu0
      %v808 = vpop.f32.mrf.mxu0
      %v809 = vadd.f32 %v641, %v808
      %v810 = vpop.f32.mrf.mxu0
      %811 = vmatprep.mubr.bf16.mxu0 0
      %812 = vmatmul.mubr.bf16.gmra.mxu0 %v692
      %v813 = vpop.f32.mrf.mxu0
      %v814 = vadd.f32 %v641, %v813
      %v815 = vpop.f32.mrf.mxu0
      %v816 = vpop.f32.mrf.mxu0
      %v817 = vadd.f32 %v641, %v816
      %v818 = vpop.f32.mrf.mxu0
      %819 = vmatprep.mubr.bf16.mxu0 0
      %820 = vmatmul.mubr.bf16.gmra.mxu0 %v695
      %v821 = vpop.f32.mrf.mxu0
      %v822 = vadd.f32 %v641, %v821
      %v823 = vpop.f32.mrf.mxu0
      %v824 = vpop.f32.mrf.mxu0
      %v825 = vadd.f32 %v641, %v824
      %v826 = vpop.f32.mrf.mxu0
      %827 = vmatprep.mubr.bf16.mxu0 0
      %828 = vmatmul.mubr.bf16.gmra.mxu0 %v698
      %v829 = vpop.f32.mrf.mxu0
      %v830 = vadd.f32 %v641, %v829
      %v831 = vpop.f32.mrf.mxu0
      %v832 = vpop.f32.mrf.mxu0
      %v833 = vadd.f32 %v641, %v832
      %v834 = vpop.f32.mrf.mxu0
      %835 = vmatprep.mubr.bf16.mxu0 0
      %836 = vmatmul.mubr.bf16.gmra.mxu0 %v701
      %v837 = vpop.f32.mrf.mxu0
      %v838 = vadd.f32 %v641, %v837
      %v839 = vpop.f32.mrf.mxu0
      %v840 = vpop.f32.mrf.mxu0
      %v841 = vadd.f32 %v641, %v840
      %v842 = vpop.f32.mrf.mxu0
      %843 = vmatprep.mubr.bf16.mxu0 0
      %844 = vmatmul.mubr.bf16.gmra.mxu0 %v704
      %v845 = vpop.f32.mrf.mxu0
      %v846 = vadd.f32 %v641, %v845
      %v847 = vpop.f32.mrf.mxu0
      %v848 = vpop.f32.mrf.mxu0
      %v849 = vadd.f32 %v641, %v848
      %v850 = vpop.f32.mrf.mxu0
      %851 = vmatprep.mubr.bf16.mxu0 0
      %852 = vmatmul.mubr.bf16.gmra.mxu0 %v707
      %v853 = vpop.f32.mrf.mxu0
      %v854 = vadd.f32 %v641, %v853
      %v855 = vpop.f32.mrf.mxu0
      %v856 = vpop.f32.mrf.mxu0
      %v857 = vadd.f32 %v641, %v856
      %v858 = vpop.f32.mrf.mxu0
      %859 = vmatprep.mubr.bf16.mxu0 0
      %860 = vmatmul.mubr.bf16.gmra.mxu0 %v710
      %v861 = vpop.f32.mrf.mxu0
      %v862 = vadd.f32 %v641, %v861
      %v863 = vpop.f32.mrf.mxu0
      %v864 = vpop.f32.mrf.mxu0
      %v865 = vadd.f32 %v641, %v864
      %v866 = vpop.f32.mrf.mxu0
      %867 = vmatprep.mubr.bf16.mxu0 0
      %868 = vmatmul.mubr.bf16.gmra.mxu0 %v713
      %v869 = vpop.f32.mrf.mxu0
      %v870 = vadd.f32 %v641, %v869
      %v871 = vpop.f32.mrf.mxu0
      %v872 = vpop.f32.mrf.mxu0
      %v873 = vadd.f32 %v641, %v872
      %v874 = vpop.f32.mrf.mxu0
      %875 = vdwg.mxu0
      %v876 = vadd.f32 %v750, %v283
      %v877 = vadd.f32 %v753, %v284
      %v878 = vadd.f32 %v758, %v285
      %v879 = vadd.f32 %v761, %v286
      %v880 = vadd.f32 %v766, %v287
      %v881 = vadd.f32 %v769, %v288
      %v882 = vadd.f32 %v774, %v289
      %v883 = vadd.f32 %v777, %v290
      %v884 = vadd.f32 %v782, %v291
      %v885 = vadd.f32 %v785, %v292
      %v886 = vadd.f32 %v790, %v293
      %v887 = vadd.f32 %v793, %v294
      %v888 = vadd.f32 %v798, %v295
      %v889 = vadd.f32 %v801, %v296
      %v890 = vadd.f32 %v806, %v297
      %v891 = vadd.f32 %v809, %v298
      %v892 = vadd.f32 %v814, %v299
      %v893 = vadd.f32 %v817, %v300
      %v894 = vadd.f32 %v822, %v301
      %v895 = vadd.f32 %v825, %v302
      %v896 = vadd.f32 %v830, %v303
      %v897 = vadd.f32 %v833, %v304
      %v898 = vadd.f32 %v838, %v305
      %v899 = vadd.f32 %v841, %v306
      %v900 = vadd.f32 %v846, %v307
      %v901 = vadd.f32 %v849, %v308
      %v902 = vadd.f32 %v854, %v309
      %v903 = vadd.f32 %v857, %v310
      %v904 = vadd.f32 %v862, %v311
      %v905 = vadd.f32 %v865, %v312
      %v906 = vadd.f32 %v870, %v313
      %v907 = vadd.f32 %v873, %v314
      %v908 = vsel %vm370, %v876, 0.0
      %909 = vadd.xlane.f32.xlu0 %v908
      %v910 = vpop.xlane.xlu0 %909
      %v911 = vsel %vm370, %v877, 0.0
      %912 = vadd.xlane.f32.xlu0 %v911
      %v913 = vpop.xlane.xlu0 %912
      %v914 = vsel %vm370, %v878, 0.0
      %915 = vadd.xlane.f32.xlu0 %v914
      %v916 = vpop.xlane.xlu0 %915
      %v917 = vsel %vm370, %v879, 0.0
      %918 = vadd.xlane.f32.xlu0 %v917
      %v919 = vpop.xlane.xlu0 %918
      %v920 = vsel %vm370, %v880, 0.0
      %921 = vadd.xlane.f32.xlu0 %v920
      %v922 = vpop.xlane.xlu0 %921
      %v923 = vsel %vm370, %v881, 0.0
      %924 = vadd.xlane.f32.xlu0 %v923
      %v925 = vpop.xlane.xlu0 %924
      %v926 = vsel %vm370, %v882, 0.0
      %927 = vadd.xlane.f32.xlu0 %v926
      %v928 = vpop.xlane.xlu0 %927
      %v929 = vsel %vm370, %v883, 0.0
      %930 = vadd.xlane.f32.xlu0 %v929
      %v931 = vpop.xlane.xlu0 %930
      %v932 = vsel %vm370, %v884, 0.0
      %933 = vadd.xlane.f32.xlu0 %v932
      %v934 = vpop.xlane.xlu0 %933
      %v935 = vsel %vm370, %v885, 0.0
      %936 = vadd.xlane.f32.xlu0 %v935
      %v937 = vpop.xlane.xlu0 %936
      %v938 = vsel %vm370, %v886, 0.0
      %939 = vadd.xlane.f32.xlu0 %v938
      %v940 = vpop.xlane.xlu0 %939
      %v941 = vsel %vm370, %v887, 0.0
      %942 = vadd.xlane.f32.xlu0 %v941
      %v943 = vpop.xlane.xlu0 %942
      %v944 = vsel %vm370, %v888, 0.0
      %945 = vadd.xlane.f32.xlu0 %v944
      %v946 = vpop.xlane.xlu0 %945
      %v947 = vsel %vm370, %v889, 0.0
      %948 = vadd.xlane.f32.xlu0 %v947
      %v949 = vpop.xlane.xlu0 %948
      %v950 = vsel %vm370, %v890, 0.0
      %951 = vadd.xlane.f32.xlu0 %v950
      %v952 = vpop.xlane.xlu0 %951
      %v953 = vsel %vm370, %v891, 0.0
      %954 = vadd.xlane.f32.xlu0 %v953
      %v955 = vpop.xlane.xlu0 %954
      %v956 = vsel %vm370, %v892, 0.0
      %957 = vadd.xlane.f32.xlu0 %v956
      %v958 = vpop.xlane.xlu0 %957
      %v959 = vsel %vm370, %v893, 0.0
      %960 = vadd.xlane.f32.xlu0 %v959
      %v961 = vpop.xlane.xlu0 %960
      %v962 = vsel %vm370, %v894, 0.0
      %963 = vadd.xlane.f32.xlu0 %v962
      %v964 = vpop.xlane.xlu0 %963
      %v965 = vsel %vm370, %v895, 0.0
      %966 = vadd.xlane.f32.xlu0 %v965
      %v967 = vpop.xlane.xlu0 %966
      %v968 = vsel %vm370, %v896, 0.0
      %969 = vadd.xlane.f32.xlu0 %v968
      %v970 = vpop.xlane.xlu0 %969
      %v971 = vsel %vm370, %v897, 0.0
      %972 = vadd.xlane.f32.xlu0 %v971
      %v973 = vpop.xlane.xlu0 %972
      %v974 = vsel %vm370, %v898, 0.0
      %975 = vadd.xlane.f32.xlu0 %v974
      %v976 = vpop.xlane.xlu0 %975
      %v977 = vsel %vm370, %v899, 0.0
      %978 = vadd.xlane.f32.xlu0 %v977
      %v979 = vpop.xlane.xlu0 %978
      %v980 = vsel %vm370, %v900, 0.0
      %981 = vadd.xlane.f32.xlu0 %v980
      %v982 = vpop.xlane.xlu0 %981
      %v983 = vsel %vm370, %v901, 0.0
      %984 = vadd.xlane.f32.xlu0 %v983
      %v985 = vpop.xlane.xlu0 %984
      %v986 = vsel %vm370, %v902, 0.0
      %987 = vadd.xlane.f32.xlu0 %v986
      %v988 = vpop.xlane.xlu0 %987
      %v989 = vsel %vm370, %v903, 0.0
      %990 = vadd.xlane.f32.xlu0 %v989
      %v991 = vpop.xlane.xlu0 %990
      %v992 = vsel %vm370, %v904, 0.0
      %993 = vadd.xlane.f32.xlu0 %v992
      %v994 = vpop.xlane.xlu0 %993
      %v995 = vsel %vm370, %v905, 0.0
      %996 = vadd.xlane.f32.xlu0 %v995
      %v997 = vpop.xlane.xlu0 %996
      %v998 = vsel %vm370, %v906, 0.0
      %999 = vadd.xlane.f32.xlu0 %v998
      %v1000 = vpop.xlane.xlu0 %999
      %v1001 = vsel %vm370, %v907, 0.0
      %1002 = vadd.xlane.f32.xlu0 %v1001
      %v1003 = vpop.xlane.xlu0 %1002
      %v1004 = vrcp.pop 64.0
      %v1005 = vmul.f32 %v910, %v1004
      %v1006 = vmul.f32 %v913, %v1004
      %v1007 = vmul.f32 %v916, %v1004
      %v1008 = vmul.f32 %v919, %v1004
      %v1009 = vmul.f32 %v922, %v1004
      %v1010 = vmul.f32 %v925, %v1004
      %v1011 = vmul.f32 %v928, %v1004
      %v1012 = vmul.f32 %v931, %v1004
      %v1013 = vmul.f32 %v934, %v1004
      %v1014 = vmul.f32 %v937, %v1004
      %v1015 = vmul.f32 %v940, %v1004
      %v1016 = vmul.f32 %v943, %v1004
      %v1017 = vmul.f32 %v946, %v1004
      %v1018 = vmul.f32 %v949, %v1004
      %v1019 = vmul.f32 %v952, %v1004
      %v1020 = vmul.f32 %v955, %v1004
      %v1021 = vmul.f32 %v958, %v1004
      %v1022 = vmul.f32 %v961, %v1004
      %v1023 = vmul.f32 %v964, %v1004
      %v1024 = vmul.f32 %v967, %v1004
      %v1025 = vmul.f32 %v970, %v1004
      %v1026 = vmul.f32 %v973, %v1004
      %v1027 = vmul.f32 %v976, %v1004
      %v1028 = vmul.f32 %v979, %v1004
      %v1029 = vmul.f32 %v982, %v1004
      %v1030 = vmul.f32 %v985, %v1004
      %v1031 = vmul.f32 %v988, %v1004
      %v1032 = vmul.f32 %v991, %v1004
      %v1033 = vmul.f32 %v994, %v1004
      %v1034 = vmul.f32 %v997, %v1004
      %v1035 = vmul.f32 %v1000, %v1004
      %v1036 = vmul.f32 %v1003, %v1004
      %v1037 = vsub.f32 %v876, %v1005
      %v1038 = vsub.f32 %v877, %v1006
      %v1039 = vsub.f32 %v878, %v1007
      %v1040 = vsub.f32 %v879, %v1008
      %v1041 = vsub.f32 %v880, %v1009
      %v1042 = vsub.f32 %v881, %v1010
      %v1043 = vsub.f32 %v882, %v1011
      %v1044 = vsub.f32 %v883, %v1012
      %v1045 = vsub.f32 %v884, %v1013
      %v1046 = vsub.f32 %v885, %v1014
      %v1047 = vsub.f32 %v886, %v1015
      %v1048 = vsub.f32 %v887, %v1016
      %v1049 = vsub.f32 %v888, %v1017
      %v1050 = vsub.f32 %v889, %v1018
      %v1051 = vsub.f32 %v890, %v1019
      %v1052 = vsub.f32 %v891, %v1020
      %v1053 = vsub.f32 %v892, %v1021
      %v1054 = vsub.f32 %v893, %v1022
      %v1055 = vsub.f32 %v894, %v1023
      %v1056 = vsub.f32 %v895, %v1024
      %v1057 = vsub.f32 %v896, %v1025
      %v1058 = vsub.f32 %v897, %v1026
      %v1059 = vsub.f32 %v898, %v1027
      %v1060 = vsub.f32 %v899, %v1028
      %v1061 = vsub.f32 %v900, %v1029
      %v1062 = vsub.f32 %v901, %v1030
      %v1063 = vsub.f32 %v902, %v1031
      %v1064 = vsub.f32 %v903, %v1032
      %v1065 = vsub.f32 %v904, %v1033
      %v1066 = vsub.f32 %v905, %v1034
      %v1067 = vsub.f32 %v906, %v1035
      %v1068 = vsub.f32 %v907, %v1036
      %v1069 = vmul.f32 %v1037, %v1037
      %v1070 = vmul.f32 %v1038, %v1038
      %v1071 = vmul.f32 %v1039, %v1039
      %v1072 = vmul.f32 %v1040, %v1040
      %v1073 = vmul.f32 %v1041, %v1041
      %v1074 = vmul.f32 %v1042, %v1042
      %v1075 = vmul.f32 %v1043, %v1043
      %v1076 = vmul.f32 %v1044, %v1044
      %v1077 = vmul.f32 %v1045, %v1045
      %v1078 = vmul.f32 %v1046, %v1046
      %v1079 = vmul.f32 %v1047, %v1047
      %v1080 = vmul.f32 %v1048, %v1048
      %v1081 = vmul.f32 %v1049, %v1049
      %v1082 = vmul.f32 %v1050, %v1050
      %v1083 = vmul.f32 %v1051, %v1051
      %v1084 = vmul.f32 %v1052, %v1052
      %v1085 = vmul.f32 %v1053, %v1053
      %v1086 = vmul.f32 %v1054, %v1054
      %v1087 = vmul.f32 %v1055, %v1055
      %v1088 = vmul.f32 %v1056, %v1056
      %v1089 = vmul.f32 %v1057, %v1057
      %v1090 = vmul.f32 %v1058, %v1058
      %v1091 = vmul.f32 %v1059, %v1059
      %v1092 = vmul.f32 %v1060, %v1060
      %v1093 = vmul.f32 %v1061, %v1061
      %v1094 = vmul.f32 %v1062, %v1062
      %v1095 = vmul.f32 %v1063, %v1063
      %v1096 = vmul.f32 %v1064, %v1064
      %v1097 = vmul.f32 %v1065, %v1065
      %v1098 = vmul.f32 %v1066, %v1066
      %v1099 = vmul.f32 %v1067, %v1067
      %v1100 = vmul.f32 %v1068, %v1068
      %v1101 = vsel %vm370, %v1069, 0.0
      %1102 = vadd.xlane.f32.xlu0 %v1101
      %v1103 = vpop.xlane.xlu0 %1102
      %v1104 = vsel %vm370, %v1070, 0.0
      %1105 = vadd.xlane.f32.xlu0 %v1104
      %v1106 = vpop.xlane.xlu0 %1105
      %v1107 = vsel %vm370, %v1071, 0.0
      %1108 = vadd.xlane.f32.xlu0 %v1107
      %v1109 = vpop.xlane.xlu0 %1108
      %v1110 = vsel %vm370, %v1072, 0.0
      %1111 = vadd.xlane.f32.xlu0 %v1110
      %v1112 = vpop.xlane.xlu0 %1111
      %v1113 = vsel %vm370, %v1073, 0.0
      %1114 = vadd.xlane.f32.xlu0 %v1113
      %v1115 = vpop.xlane.xlu0 %1114
      %v1116 = vsel %vm370, %v1074, 0.0
      %1117 = vadd.xlane.f32.xlu0 %v1116
      %v1118 = vpop.xlane.xlu0 %1117
      %v1119 = vsel %vm370, %v1075, 0.0
      %1120 = vadd.xlane.f32.xlu0 %v1119
      %v1121 = vpop.xlane.xlu0 %1120
      %v1122 = vsel %vm370, %v1076, 0.0
      %1123 = vadd.xlane.f32.xlu0 %v1122
      %v1124 = vpop.xlane.xlu0 %1123
      %v1125 = vsel %vm370, %v1077, 0.0
      %1126 = vadd.xlane.f32.xlu0 %v1125
      %v1127 = vpop.xlane.xlu0 %1126
      %v1128 = vsel %vm370, %v1078, 0.0
      %1129 = vadd.xlane.f32.xlu0 %v1128
      %v1130 = vpop.xlane.xlu0 %1129
      %v1131 = vsel %vm370, %v1079, 0.0
      %1132 = vadd.xlane.f32.xlu0 %v1131
      %v1133 = vpop.xlane.xlu0 %1132
      %v1134 = vsel %vm370, %v1080, 0.0
      %1135 = vadd.xlane.f32.xlu0 %v1134
      %v1136 = vpop.xlane.xlu0 %1135
      %v1137 = vsel %vm370, %v1081, 0.0
      %1138 = vadd.xlane.f32.xlu0 %v1137
      %v1139 = vpop.xlane.xlu0 %1138
      %v1140 = vsel %vm370, %v1082, 0.0
      %1141 = vadd.xlane.f32.xlu0 %v1140
      %v1142 = vpop.xlane.xlu0 %1141
      %v1143 = vsel %vm370, %v1083, 0.0
      %1144 = vadd.xlane.f32.xlu0 %v1143
      %v1145 = vpop.xlane.xlu0 %1144
      %v1146 = vsel %vm370, %v1084, 0.0
      %1147 = vadd.xlane.f32.xlu0 %v1146
      %v1148 = vpop.xlane.xlu0 %1147
      %v1149 = vsel %vm370, %v1085, 0.0
      %1150 = vadd.xlane.f32.xlu0 %v1149
      %v1151 = vpop.xlane.xlu0 %1150
      %v1152 = vsel %vm370, %v1086, 0.0
      %1153 = vadd.xlane.f32.xlu0 %v1152
      %v1154 = vpop.xlane.xlu0 %1153
      %v1155 = vsel %vm370, %v1087, 0.0
      %1156 = vadd.xlane.f32.xlu0 %v1155
      %v1157 = vpop.xlane.xlu0 %1156
      %v1158 = vsel %vm370, %v1088, 0.0
      %1159 = vadd.xlane.f32.xlu0 %v1158
      %v1160 = vpop.xlane.xlu0 %1159
      %v1161 = vsel %vm370, %v1089, 0.0
      %1162 = vadd.xlane.f32.xlu0 %v1161
      %v1163 = vpop.xlane.xlu0 %1162
      %v1164 = vsel %vm370, %v1090, 0.0
      %1165 = vadd.xlane.f32.xlu0 %v1164
      %v1166 = vpop.xlane.xlu0 %1165
      %v1167 = vsel %vm370, %v1091, 0.0
      %1168 = vadd.xlane.f32.xlu0 %v1167
      %v1169 = vpop.xlane.xlu0 %1168
      %v1170 = vsel %vm370, %v1092, 0.0
      %1171 = vadd.xlane.f32.xlu0 %v1170
      %v1172 = vpop.xlane.xlu0 %1171
      %v1173 = vsel %vm370, %v1093, 0.0
      %1174 = vadd.xlane.f32.xlu0 %v1173
      %v1175 = vpop.xlane.xlu0 %1174
      %v1176 = vsel %vm370, %v1094, 0.0
      %1177 = vadd.xlane.f32.xlu0 %v1176
      %v1178 = vpop.xlane.xlu0 %1177
      %v1179 = vsel %vm370, %v1095, 0.0
      %1180 = vadd.xlane.f32.xlu0 %v1179
      %v1181 = vpop.xlane.xlu0 %1180
      %v1182 = vsel %vm370, %v1096, 0.0
      %1183 = vadd.xlane.f32.xlu0 %v1182
      %v1184 = vpop.xlane.xlu0 %1183
      %v1185 = vsel %vm370, %v1097, 0.0
      %1186 = vadd.xlane.f32.xlu0 %v1185
      %v1187 = vpop.xlane.xlu0 %1186
      %v1188 = vsel %vm370, %v1098, 0.0
      %1189 = vadd.xlane.f32.xlu0 %v1188
      %v1190 = vpop.xlane.xlu0 %1189
      %v1191 = vsel %vm370, %v1099, 0.0
      %1192 = vadd.xlane.f32.xlu0 %v1191
      %v1193 = vpop.xlane.xlu0 %1192
      %v1194 = vsel %vm370, %v1100, 0.0
      %1195 = vadd.xlane.f32.xlu0 %v1194
      %v1196 = vpop.xlane.xlu0 %1195
      %v1197 = vmul.f32 %v1103, 0.015873017
      %v1198 = vmul.f32 %v1106, 0.015873017
      %v1199 = vmul.f32 %v1109, 0.015873017
      %v1200 = vmul.f32 %v1112, 0.015873017
      %v1201 = vmul.f32 %v1115, 0.015873017
      %v1202 = vmul.f32 %v1118, 0.015873017
      %v1203 = vmul.f32 %v1121, 0.015873017
      %v1204 = vmul.f32 %v1124, 0.015873017
      %v1205 = vmul.f32 %v1127, 0.015873017
      %v1206 = vmul.f32 %v1130, 0.015873017
      %v1207 = vmul.f32 %v1133, 0.015873017
      %v1208 = vmul.f32 %v1136, 0.015873017
      %v1209 = vmul.f32 %v1139, 0.015873017
      %v1210 = vmul.f32 %v1142, 0.015873017
      %v1211 = vmul.f32 %v1145, 0.015873017
      %v1212 = vmul.f32 %v1148, 0.015873017
      %v1213 = vmul.f32 %v1151, 0.015873017
      %v1214 = vmul.f32 %v1154, 0.015873017
      %v1215 = vmul.f32 %v1157, 0.015873017
      %v1216 = vmul.f32 %v1160, 0.015873017
      %v1217 = vmul.f32 %v1163, 0.015873017
      %v1218 = vmul.f32 %v1166, 0.015873017
      %v1219 = vmul.f32 %v1169, 0.015873017
      %v1220 = vmul.f32 %v1172, 0.015873017
      %v1221 = vmul.f32 %v1175, 0.015873017
      %v1222 = vmul.f32 %v1178, 0.015873017
      %v1223 = vmul.f32 %v1181, 0.015873017
      %v1224 = vmul.f32 %v1184, 0.015873017
      %v1225 = vmul.f32 %v1187, 0.015873017
      %v1226 = vmul.f32 %v1190, 0.015873017
      %v1227 = vmul.f32 %v1193, 0.015873017
      %v1228 = vmul.f32 %v1196, 0.015873017
      %v1229 = vrsqrt.pop %v1197
      %v1230 = vmul.f32 %v1197, %v1229
      %vm1231 = vcmp.eq.f32.partialorder %v1197, inf
      %v1232 = vsel %vm1231, %v1197, %v1230
      %vm1233 = vcmp.eq.f32.partialorder %v1197, 0.0
      %v1234 = vand.u32 %v1197, 2147483648
      %v1235 = vsel %vm1233, %v1234, %v1232
      %v1236 = vrsqrt.pop %v1198
      %v1237 = vmul.f32 %v1198, %v1236
      %vm1238 = vcmp.eq.f32.partialorder %v1198, inf
      %v1239 = vsel %vm1238, %v1198, %v1237
      %vm1240 = vcmp.eq.f32.partialorder %v1198, 0.0
      %v1241 = vand.u32 %v1198, 2147483648
      %v1242 = vsel %vm1240, %v1241, %v1239
      %v1243 = vrsqrt.pop %v1199
      %v1244 = vmul.f32 %v1199, %v1243
      %vm1245 = vcmp.eq.f32.partialorder %v1199, inf
      %v1246 = vsel %vm1245, %v1199, %v1244
      %vm1247 = vcmp.eq.f32.partialorder %v1199, 0.0
      %v1248 = vand.u32 %v1199, 2147483648
      %v1249 = vsel %vm1247, %v1248, %v1246
      %v1250 = vrsqrt.pop %v1200
      %v1251 = vmul.f32 %v1200, %v1250
      %vm1252 = vcmp.eq.f32.partialorder %v1200, inf
      %v1253 = vsel %vm1252, %v1200, %v1251
      %vm1254 = vcmp.eq.f32.partialorder %v1200, 0.0
      %v1255 = vand.u32 %v1200, 2147483648
      %v1256 = vsel %vm1254, %v1255, %v1253
      %v1257 = vrsqrt.pop %v1201
      %v1258 = vmul.f32 %v1201, %v1257
      %vm1259 = vcmp.eq.f32.partialorder %v1201, inf
      %v1260 = vsel %vm1259, %v1201, %v1258
      %vm1261 = vcmp.eq.f32.partialorder %v1201, 0.0
      %v1262 = vand.u32 %v1201, 2147483648
      %v1263 = vsel %vm1261, %v1262, %v1260
      %v1264 = vrsqrt.pop %v1202
      %v1265 = vmul.f32 %v1202, %v1264
      %vm1266 = vcmp.eq.f32.partialorder %v1202, inf
      %v1267 = vsel %vm1266, %v1202, %v1265
      %vm1268 = vcmp.eq.f32.partialorder %v1202, 0.0
      %v1269 = vand.u32 %v1202, 2147483648
      %v1270 = vsel %vm1268, %v1269, %v1267
      %v1271 = vrsqrt.pop %v1203
      %v1272 = vmul.f32 %v1203, %v1271
      %vm1273 = vcmp.eq.f32.partialorder %v1203, inf
      %v1274 = vsel %vm1273, %v1203, %v1272
      %vm1275 = vcmp.eq.f32.partialorder %v1203, 0.0
      %v1276 = vand.u32 %v1203, 2147483648
      %v1277 = vsel %vm1275, %v1276, %v1274
      %v1278 = vrsqrt.pop %v1204
      %v1279 = vmul.f32 %v1204, %v1278
      %vm1280 = vcmp.eq.f32.partialorder %v1204, inf
      %v1281 = vsel %vm1280, %v1204, %v1279
      %vm1282 = vcmp.eq.f32.partialorder %v1204, 0.0
      %v1283 = vand.u32 %v1204, 2147483648
      %v1284 = vsel %vm1282, %v1283, %v1281
      %v1285 = vrsqrt.pop %v1205
      %v1286 = vmul.f32 %v1205, %v1285
      %vm1287 = vcmp.eq.f32.partialorder %v1205, inf
      %v1288 = vsel %vm1287, %v1205, %v1286
      %vm1289 = vcmp.eq.f32.partialorder %v1205, 0.0
      %v1290 = vand.u32 %v1205, 2147483648
      %v1291 = vsel %vm1289, %v1290, %v1288
      %v1292 = vrsqrt.pop %v1206
      %v1293 = vmul.f32 %v1206, %v1292
      %vm1294 = vcmp.eq.f32.partialorder %v1206, inf
      %v1295 = vsel %vm1294, %v1206, %v1293
      %vm1296 = vcmp.eq.f32.partialorder %v1206, 0.0
      %v1297 = vand.u32 %v1206, 2147483648
      %v1298 = vsel %vm1296, %v1297, %v1295
      %v1299 = vrsqrt.pop %v1207
      %v1300 = vmul.f32 %v1207, %v1299
      %vm1301 = vcmp.eq.f32.partialorder %v1207, inf
      %v1302 = vsel %vm1301, %v1207, %v1300
      %vm1303 = vcmp.eq.f32.partialorder %v1207, 0.0
      %v1304 = vand.u32 %v1207, 2147483648
      %v1305 = vsel %vm1303, %v1304, %v1302
      %v1306 = vrsqrt.pop %v1208
      %v1307 = vmul.f32 %v1208, %v1306
      %vm1308 = vcmp.eq.f32.partialorder %v1208, inf
      %v1309 = vsel %vm1308, %v1208, %v1307
      %vm1310 = vcmp.eq.f32.partialorder %v1208, 0.0
      %v1311 = vand.u32 %v1208, 2147483648
      %v1312 = vsel %vm1310, %v1311, %v1309
      %v1313 = vrsqrt.pop %v1209
      %v1314 = vmul.f32 %v1209, %v1313
      %vm1315 = vcmp.eq.f32.partialorder %v1209, inf
      %v1316 = vsel %vm1315, %v1209, %v1314
      %vm1317 = vcmp.eq.f32.partialorder %v1209, 0.0
      %v1318 = vand.u32 %v1209, 2147483648
      %v1319 = vsel %vm1317, %v1318, %v1316
      %v1320 = vrsqrt.pop %v1210
      %v1321 = vmul.f32 %v1210, %v1320
      %vm1322 = vcmp.eq.f32.partialorder %v1210, inf
      %v1323 = vsel %vm1322, %v1210, %v1321
      %vm1324 = vcmp.eq.f32.partialorder %v1210, 0.0
      %v1325 = vand.u32 %v1210, 2147483648
      %v1326 = vsel %vm1324, %v1325, %v1323
      %v1327 = vrsqrt.pop %v1211
      %v1328 = vmul.f32 %v1211, %v1327
      %vm1329 = vcmp.eq.f32.partialorder %v1211, inf
      %v1330 = vsel %vm1329, %v1211, %v1328
      %vm1331 = vcmp.eq.f32.partialorder %v1211, 0.0
      %v1332 = vand.u32 %v1211, 2147483648
      %v1333 = vsel %vm1331, %v1332, %v1330
      %v1334 = vrsqrt.pop %v1212
      %v1335 = vmul.f32 %v1212, %v1334
      %vm1336 = vcmp.eq.f32.partialorder %v1212, inf
      %v1337 = vsel %vm1336, %v1212, %v1335
      %vm1338 = vcmp.eq.f32.partialorder %v1212, 0.0
      %v1339 = vand.u32 %v1212, 2147483648
      %v1340 = vsel %vm1338, %v1339, %v1337
      %v1341 = vrsqrt.pop %v1213
      %v1342 = vmul.f32 %v1213, %v1341
      %vm1343 = vcmp.eq.f32.partialorder %v1213, inf
      %v1344 = vsel %vm1343, %v1213, %v1342
      %vm1345 = vcmp.eq.f32.partialorder %v1213, 0.0
      %v1346 = vand.u32 %v1213, 2147483648
      %v1347 = vsel %vm1345, %v1346, %v1344
      %v1348 = vrsqrt.pop %v1214
      %v1349 = vmul.f32 %v1214, %v1348
      %vm1350 = vcmp.eq.f32.partialorder %v1214, inf
      %v1351 = vsel %vm1350, %v1214, %v1349
      %vm1352 = vcmp.eq.f32.partialorder %v1214, 0.0
      %v1353 = vand.u32 %v1214, 2147483648
      %v1354 = vsel %vm1352, %v1353, %v1351
      %v1355 = vrsqrt.pop %v1215
      %v1356 = vmul.f32 %v1215, %v1355
      %vm1357 = vcmp.eq.f32.partialorder %v1215, inf
      %v1358 = vsel %vm1357, %v1215, %v1356
      %vm1359 = vcmp.eq.f32.partialorder %v1215, 0.0
      %v1360 = vand.u32 %v1215, 2147483648
      %v1361 = vsel %vm1359, %v1360, %v1358
      %v1362 = vrsqrt.pop %v1216
      %v1363 = vmul.f32 %v1216, %v1362
      %vm1364 = vcmp.eq.f32.partialorder %v1216, inf
      %v1365 = vsel %vm1364, %v1216, %v1363
      %vm1366 = vcmp.eq.f32.partialorder %v1216, 0.0
      %v1367 = vand.u32 %v1216, 2147483648
      %v1368 = vsel %vm1366, %v1367, %v1365
      %v1369 = vrsqrt.pop %v1217
      %v1370 = vmul.f32 %v1217, %v1369
      %vm1371 = vcmp.eq.f32.partialorder %v1217, inf
      %v1372 = vsel %vm1371, %v1217, %v1370
      %vm1373 = vcmp.eq.f32.partialorder %v1217, 0.0
      %v1374 = vand.u32 %v1217, 2147483648
      %v1375 = vsel %vm1373, %v1374, %v1372
      %v1376 = vrsqrt.pop %v1218
      %v1377 = vmul.f32 %v1218, %v1376
      %vm1378 = vcmp.eq.f32.partialorder %v1218, inf
      %v1379 = vsel %vm1378, %v1218, %v1377
      %vm1380 = vcmp.eq.f32.partialorder %v1218, 0.0
      %v1381 = vand.u32 %v1218, 2147483648
      %v1382 = vsel %vm1380, %v1381, %v1379
      %v1383 = vrsqrt.pop %v1219
      %v1384 = vmul.f32 %v1219, %v1383
      %vm1385 = vcmp.eq.f32.partialorder %v1219, inf
      %v1386 = vsel %vm1385, %v1219, %v1384
      %vm1387 = vcmp.eq.f32.partialorder %v1219, 0.0
      %v1388 = vand.u32 %v1219, 2147483648
      %v1389 = vsel %vm1387, %v1388, %v1386
      %v1390 = vrsqrt.pop %v1220
      %v1391 = vmul.f32 %v1220, %v1390
      %vm1392 = vcmp.eq.f32.partialorder %v1220, inf
      %v1393 = vsel %vm1392, %v1220, %v1391
      %vm1394 = vcmp.eq.f32.partialorder %v1220, 0.0
      %v1395 = vand.u32 %v1220, 2147483648
      %v1396 = vsel %vm1394, %v1395, %v1393
      %v1397 = vrsqrt.pop %v1221
      %v1398 = vmul.f32 %v1221, %v1397
      %vm1399 = vcmp.eq.f32.partialorder %v1221, inf
      %v1400 = vsel %vm1399, %v1221, %v1398
      %vm1401 = vcmp.eq.f32.partialorder %v1221, 0.0
      %v1402 = vand.u32 %v1221, 2147483648
      %v1403 = vsel %vm1401, %v1402, %v1400
      %v1404 = vrsqrt.pop %v1222
      %v1405 = vmul.f32 %v1222, %v1404
      %vm1406 = vcmp.eq.f32.partialorder %v1222, inf
      %v1407 = vsel %vm1406, %v1222, %v1405
      %vm1408 = vcmp.eq.f32.partialorder %v1222, 0.0
      %v1409 = vand.u32 %v1222, 2147483648
      %v1410 = vsel %vm1408, %v1409, %v1407
      %v1411 = vrsqrt.pop %v1223
      %v1412 = vmul.f32 %v1223, %v1411
      %vm1413 = vcmp.eq.f32.partialorder %v1223, inf
      %v1414 = vsel %vm1413, %v1223, %v1412
      %vm1415 = vcmp.eq.f32.partialorder %v1223, 0.0
      %v1416 = vand.u32 %v1223, 2147483648
      %v1417 = vsel %vm1415, %v1416, %v1414
      %v1418 = vrsqrt.pop %v1224
      %v1419 = vmul.f32 %v1224, %v1418
      %vm1420 = vcmp.eq.f32.partialorder %v1224, inf
      %v1421 = vsel %vm1420, %v1224, %v1419
      %vm1422 = vcmp.eq.f32.partialorder %v1224, 0.0
      %v1423 = vand.u32 %v1224, 2147483648
      %v1424 = vsel %vm1422, %v1423, %v1421
      %v1425 = vrsqrt.pop %v1225
      %v1426 = vmul.f32 %v1225, %v1425
      %vm1427 = vcmp.eq.f32.partialorder %v1225, inf
      %v1428 = vsel %vm1427, %v1225, %v1426
      %vm1429 = vcmp.eq.f32.partialorder %v1225, 0.0
      %v1430 = vand.u32 %v1225, 2147483648
      %v1431 = vsel %vm1429, %v1430, %v1428
      %v1432 = vrsqrt.pop %v1226
      %v1433 = vmul.f32 %v1226, %v1432
      %vm1434 = vcmp.eq.f32.partialorder %v1226, inf
      %v1435 = vsel %vm1434, %v1226, %v1433
      %vm1436 = vcmp.eq.f32.partialorder %v1226, 0.0
      %v1437 = vand.u32 %v1226, 2147483648
      %v1438 = vsel %vm1436, %v1437, %v1435
      %v1439 = vrsqrt.pop %v1227
      %v1440 = vmul.f32 %v1227, %v1439
      %vm1441 = vcmp.eq.f32.partialorder %v1227, inf
      %v1442 = vsel %vm1441, %v1227, %v1440
      %vm1443 = vcmp.eq.f32.partialorder %v1227, 0.0
      %v1444 = vand.u32 %v1227, 2147483648
      %v1445 = vsel %vm1443, %v1444, %v1442
      %v1446 = vrsqrt.pop %v1228
      %v1447 = vmul.f32 %v1228, %v1446
      %vm1448 = vcmp.eq.f32.partialorder %v1228, inf
      %v1449 = vsel %vm1448, %v1228, %v1447
      %vm1450 = vcmp.eq.f32.partialorder %v1228, 0.0
      %v1451 = vand.u32 %v1228, 2147483648
      %v1452 = vsel %vm1450, %v1451, %v1449
      %v1453 = vadd.f32 %v1235, 0.001
      %v1454 = vadd.f32 %v1242, 0.001
      %v1455 = vadd.f32 %v1249, 0.001
      %v1456 = vadd.f32 %v1256, 0.001
      %v1457 = vadd.f32 %v1263, 0.001
      %v1458 = vadd.f32 %v1270, 0.001
      %v1459 = vadd.f32 %v1277, 0.001
      %v1460 = vadd.f32 %v1284, 0.001
      %v1461 = vadd.f32 %v1291, 0.001
      %v1462 = vadd.f32 %v1298, 0.001
      %v1463 = vadd.f32 %v1305, 0.001
      %v1464 = vadd.f32 %v1312, 0.001
      %v1465 = vadd.f32 %v1319, 0.001
      %v1466 = vadd.f32 %v1326, 0.001
      %v1467 = vadd.f32 %v1333, 0.001
      %v1468 = vadd.f32 %v1340, 0.001
      %v1469 = vadd.f32 %v1347, 0.001
      %v1470 = vadd.f32 %v1354, 0.001
      %v1471 = vadd.f32 %v1361, 0.001
      %v1472 = vadd.f32 %v1368, 0.001
      %v1473 = vadd.f32 %v1375, 0.001
      %v1474 = vadd.f32 %v1382, 0.001
      %v1475 = vadd.f32 %v1389, 0.001
      %v1476 = vadd.f32 %v1396, 0.001
      %v1477 = vadd.f32 %v1403, 0.001
      %v1478 = vadd.f32 %v1410, 0.001
      %v1479 = vadd.f32 %v1417, 0.001
      %v1480 = vadd.f32 %v1424, 0.001
      %v1481 = vadd.f32 %v1431, 0.001
      %v1482 = vadd.f32 %v1438, 0.001
      %v1483 = vadd.f32 %v1445, 0.001
      %v1484 = vadd.f32 %v1452, 0.001
      %v1485 = vrcp.pop %v1453
      %v1486 = vrcp.pop %v1454
      %v1487 = vrcp.pop %v1455
      %v1488 = vrcp.pop %v1456
      %v1489 = vrcp.pop %v1457
      %v1490 = vrcp.pop %v1458
      %v1491 = vrcp.pop %v1459
      %v1492 = vrcp.pop %v1460
      %v1493 = vrcp.pop %v1461
      %v1494 = vrcp.pop %v1462
      %v1495 = vrcp.pop %v1463
      %v1496 = vrcp.pop %v1464
      %v1497 = vrcp.pop %v1465
      %v1498 = vrcp.pop %v1466
      %v1499 = vrcp.pop %v1467
      %v1500 = vrcp.pop %v1468
      %v1501 = vrcp.pop %v1469
      %v1502 = vrcp.pop %v1470
      %v1503 = vrcp.pop %v1471
      %v1504 = vrcp.pop %v1472
      %v1505 = vrcp.pop %v1473
      %v1506 = vrcp.pop %v1474
      %v1507 = vrcp.pop %v1475
      %v1508 = vrcp.pop %v1476
      %v1509 = vrcp.pop %v1477
      %v1510 = vrcp.pop %v1478
      %v1511 = vrcp.pop %v1479
      %v1512 = vrcp.pop %v1480
      %v1513 = vrcp.pop %v1481
      %v1514 = vrcp.pop %v1482
      %v1515 = vrcp.pop %v1483
      %v1516 = vrcp.pop %v1484
      %v1517 = vmul.f32 %v1037, %v1485
      %v1518 = vmul.f32 %v1038, %v1486
      %v1519 = vmul.f32 %v1039, %v1487
      %v1520 = vmul.f32 %v1040, %v1488
      %v1521 = vmul.f32 %v1041, %v1489
      %v1522 = vmul.f32 %v1042, %v1490
      %v1523 = vmul.f32 %v1043, %v1491
      %v1524 = vmul.f32 %v1044, %v1492
      %v1525 = vmul.f32 %v1045, %v1493
      %v1526 = vmul.f32 %v1046, %v1494
      %v1527 = vmul.f32 %v1047, %v1495
      %v1528 = vmul.f32 %v1048, %v1496
      %v1529 = vmul.f32 %v1049, %v1497
      %v1530 = vmul.f32 %v1050, %v1498
      %v1531 = vmul.f32 %v1051, %v1499
      %v1532 = vmul.f32 %v1052, %v1500
      %v1533 = vmul.f32 %v1053, %v1501
      %v1534 = vmul.f32 %v1054, %v1502
      %v1535 = vmul.f32 %v1055, %v1503
      %v1536 = vmul.f32 %v1056, %v1504
      %v1537 = vmul.f32 %v1057, %v1505
      %v1538 = vmul.f32 %v1058, %v1506
      %v1539 = vmul.f32 %v1059, %v1507
      %v1540 = vmul.f32 %v1060, %v1508
      %v1541 = vmul.f32 %v1061, %v1509
      %v1542 = vmul.f32 %v1062, %v1510
      %v1543 = vmul.f32 %v1063, %v1511
      %v1544 = vmul.f32 %v1064, %v1512
      %v1545 = vmul.f32 %v1065, %v1513
      %v1546 = vmul.f32 %v1066, %v1514
      %v1547 = vmul.f32 %v1067, %v1515
      %v1548 = vmul.f32 %v1068, %v1516
      %v1549 = vld [vmem:[%s5] sm:$0x1]
      %v1551 = vlaneseq
      %v1552 = vshrl.u32 %v1551, 7
      %v1553 = vsub.s32 0, %v1552
      %v1554 = vrot.slane %v1549, %v1553
      %v1556 = vmul.f32 %v1517, %v1554
      %v1557 = vmul.f32 %v1518, %v1554
      %v1558 = vmul.f32 %v1519, %v1554
      %v1559 = vmul.f32 %v1520, %v1554
      %v1560 = vmul.f32 %v1521, %v1554
      %v1561 = vmul.f32 %v1522, %v1554
      %v1562 = vmul.f32 %v1523, %v1554
      %v1563 = vmul.f32 %v1524, %v1554
      %v1564 = vmul.f32 %v1525, %v1554
      %v1565 = vmul.f32 %v1526, %v1554
      %v1566 = vmul.f32 %v1527, %v1554
      %v1567 = vmul.f32 %v1528, %v1554
      %v1568 = vmul.f32 %v1529, %v1554
      %v1569 = vmul.f32 %v1530, %v1554
      %v1570 = vmul.f32 %v1531, %v1554
      %v1571 = vmul.f32 %v1532, %v1554
      %v1572 = vmul.f32 %v1533, %v1554
      %v1573 = vmul.f32 %v1534, %v1554
      %v1574 = vmul.f32 %v1535, %v1554
      %v1575 = vmul.f32 %v1536, %v1554
      %v1576 = vmul.f32 %v1537, %v1554
      %v1577 = vmul.f32 %v1538, %v1554
      %v1578 = vmul.f32 %v1539, %v1554
      %v1579 = vmul.f32 %v1540, %v1554
      %v1580 = vmul.f32 %v1541, %v1554
      %v1581 = vmul.f32 %v1542, %v1554
      %v1582 = vmul.f32 %v1543, %v1554
      %v1583 = vmul.f32 %v1544, %v1554
      %v1584 = vmul.f32 %v1545, %v1554
      %v1585 = vmul.f32 %v1546, %v1554
      %v1586 = vmul.f32 %v1547, %v1554
      %v1587 = vmul.f32 %v1548, %v1554
      %v1588 = vld [vmem:[%s6] sm:$0x1]
      %v1590 = vlaneseq
      %v1591 = vshrl.u32 %v1590, 7
      %v1592 = vsub.s32 0, %v1591
      %v1593 = vrot.slane %v1588, %v1592
      %v1595 = vadd.f32 %v1556, %v1593
      %v1596 = vadd.f32 %v1557, %v1593
      %v1597 = vadd.f32 %v1558, %v1593
      %v1598 = vadd.f32 %v1559, %v1593
      %v1599 = vadd.f32 %v1560, %v1593
      %v1600 = vadd.f32 %v1561, %v1593
      %v1601 = vadd.f32 %v1562, %v1593
      %v1602 = vadd.f32 %v1563, %v1593
      %v1603 = vadd.f32 %v1564, %v1593
      %v1604 = vadd.f32 %v1565, %v1593
      %v1605 = vadd.f32 %v1566, %v1593
      %v1606 = vadd.f32 %v1567, %v1593
      %v1607 = vadd.f32 %v1568, %v1593
      %v1608 = vadd.f32 %v1569, %v1593
      %v1609 = vadd.f32 %v1570, %v1593
      %v1610 = vadd.f32 %v1571, %v1593
      %v1611 = vadd.f32 %v1572, %v1593
      %v1612 = vadd.f32 %v1573, %v1593
      %v1613 = vadd.f32 %v1574, %v1593
      %v1614 = vadd.f32 %v1575, %v1593
      %v1615 = vadd.f32 %v1576, %v1593
      %v1616 = vadd.f32 %v1577, %v1593
      %v1617 = vadd.f32 %v1578, %v1593
      %v1618 = vadd.f32 %v1579, %v1593
      %v1619 = vadd.f32 %v1580, %v1593
      %v1620 = vadd.f32 %v1581, %v1593
      %v1621 = vadd.f32 %v1582, %v1593
      %v1622 = vadd.f32 %v1583, %v1593
      %v1623 = vadd.f32 %v1584, %v1593
      %v1624 = vadd.f32 %v1585, %v1593
      %v1625 = vadd.f32 %v1586, %v1593
      %v1626 = vadd.f32 %v1587, %v1593
      %1627 = vst.msk [vmem:[%s280] sm:$0xff] %vm370, %v1595
      %1628 = vst.msk [vmem:[%s280 + $0x8] sm:$0xff] %vm370, %v1596
      %1629 = vst.msk [vmem:[%s280 + $0x10] sm:$0xff] %vm370, %v1597
      %1630 = vst.msk [vmem:[%s280 + $0x18] sm:$0xff] %vm370, %v1598
      %1631 = vst.msk [vmem:[%s280 + $0x20] sm:$0xff] %vm370, %v1599
      %1632 = vst.msk [vmem:[%s280 + $0x28] sm:$0xff] %vm370, %v1600
      %1633 = vst.msk [vmem:[%s280 + $0x30] sm:$0xff] %vm370, %v1601
      %1634 = vst.msk [vmem:[%s280 + $0x38] sm:$0xff] %vm370, %v1602
      %1635 = vst.msk [vmem:[%s280 + $0x40] sm:$0xff] %vm370, %v1603
      %1636 = vst.msk [vmem:[%s280 + $0x48] sm:$0xff] %vm370, %v1604
      %1637 = vst.msk [vmem:[%s280 + $0x50] sm:$0xff] %vm370, %v1605
      %1638 = vst.msk [vmem:[%s280 + $0x58] sm:$0xff] %vm370, %v1606
      %1639 = vst.msk [vmem:[%s280 + $0x60] sm:$0xff] %vm370, %v1607
      %1640 = vst.msk [vmem:[%s280 + $0x68] sm:$0xff] %vm370, %v1608
      %1641 = vst.msk [vmem:[%s280 + $0x70] sm:$0xff] %vm370, %v1609
      %1642 = vst.msk [vmem:[%s280 + $0x78] sm:$0xff] %vm370, %v1610
      %1643 = vst.msk [vmem:[%s280 + $0x80] sm:$0xff] %vm370, %v1611
      %1644 = vst.msk [vmem:[%s280 + $0x88] sm:$0xff] %vm370, %v1612
      %1645 = vst.msk [vmem:[%s280 + $0x90] sm:$0xff] %vm370, %v1613
      %1646 = vst.msk [vmem:[%s280 + $0x98] sm:$0xff] %vm370, %v1614
      %1647 = vst.msk [vmem:[%s280 + $0xa0] sm:$0xff] %vm370, %v1615
      %1648 = vst.msk [vmem:[%s280 + $0xa8] sm:$0xff] %vm370, %v1616
      %1649 = vst.msk [vmem:[%s280 + $0xb0] sm:$0xff] %vm370, %v1617
      %1650 = vst.msk [vmem:[%s280 + $0xb8] sm:$0xff] %vm370, %v1618
      %1651 = vst.msk [vmem:[%s280 + $0xc0] sm:$0xff] %vm370, %v1619
      %1652 = vst.msk [vmem:[%s280 + $0xc8] sm:$0xff] %vm370, %v1620
      %1653 = vst.msk [vmem:[%s280 + $0xd0] sm:$0xff] %vm370, %v1621
      %1654 = vst.msk [vmem:[%s280 + $0xd8] sm:$0xff] %vm370, %v1622
      %1655 = vst.msk [vmem:[%s280 + $0xe0] sm:$0xff] %vm370, %v1623
      %1656 = vst.msk [vmem:[%s280 + $0xe8] sm:$0xff] %vm370, %v1624
      %1657 = vst.msk [vmem:[%s280 + $0xf0] sm:$0xff] %vm370, %v1625
      %1658 = vst.msk [vmem:[%s280 + $0xf8] sm:$0xff] %vm370, %v1626
      %s1659 = smul.u32 32, %s18
      %p1660 = scmp.lt.s32.totalorder %s1659, 63
      %s1661 = scalar_select %p1660, %s1659, 63
      %s1662 = smul.addr %s1661, 8
      %s1663 = scalar_lea.vmem %s7, %s1662
      // Predicated region
      $region49: #{tpu_custom_call.1} parent=47 // pred_check
        %p1664 = pneg %p188
      $region50: #{tpu_custom_call.1} parent=47 // pred_check_branch
        %1666 = sbr.rel (%p1664) target = $region52
      $region51: #{tpu_custom_call.1} parent=47 // pred_region
        %s1667 = smul.u32 32, %s18
      $region52: #{tpu_custom_call.1} parent=47 // pred_fallthru
        _
    $region48: #{tpu_custom_call.1} parent=5 // pred_fallthru
      _
    %p1668 = scmp.le.s32.totalorder 2, %s13
    // Predicated region
    $region53: #{tpu_custom_call.1} parent=5 // pred_check
      %p1669 = pneg %p1668
    $region54: #{tpu_custom_call.1} parent=5 // pred_check_branch
      %1671 = sbr.rel (%p1669) target = $region56
    $region55: #{tpu_custom_call.1} parent=5 // pred_region
      %s1672 = ssub.s32 %s13, 2
      // Predicated region
      $region57: #{tpu_custom_call.1} parent=55 // pred_check
        %p1673 = pneg %p194
      $region58: #{tpu_custom_call.1} parent=55 // pred_check_branch
        %1675 = sbr.rel (%p1673) target = $region60
      $region59: #{tpu_custom_call.1} parent=55 // pred_region
        %s1676 = smul.u32 32, %s19
        %p1677 = scmp.lt.s32.totalorder %s1676, 63
        %s1678 = scalar_select %p1677, %s1676, 63
        %s1679 = smul.addr %s1678, 8
        %s1680 = scalar_lea.vmem %s7, %s1679
      $region60: #{tpu_custom_call.1} parent=55 // pred_fallthru
        _
    $region56: #{tpu_custom_call.1} parent=5 // pred_fallthru
      _
  $region6: #{tpu_custom_call.1} parent=0 // loop_footer
    %s17 = sadd.s32 1, %s13
  $region7: #{tpu_custom_call.1} parent=0 // loop_footer_branch
    %12 = sbr.rel target = $region3
  $region8: #{tpu_custom_call.1} parent=0 // loop_exit
    _

</llo_original>
